<compile_context>
chip_gen: v6e
topology: v6e:2x2x1
jax: 0.10.0
libtpu: 0.0.40
codegen_flags: <defaults>
</compile_context>

<pallas_src>
import jax
import jax.numpy as jnp
from jax import lax
from jax.experimental import pallas as pl
from jax.experimental.pallas import tpu as pltpu

# Small synthetic shapes consistent with the module.
N, C_IN, H, W = 2, 4, 16, 16
C_ASPP = 8
HW = H * W                      # pixels per batch element
NP = N * HW                     # total pixels
DILATIONS = (6, 12, 18)
K_ALL = C_IN * (1 + 3 * 9)      # 4 (1x1) + 3 branches * 9 taps * 4 = 112
EPS = 3e-4                      # BatchNorm2d(c_aspp, momentum=0.0003) -> eps


# ------------------------------ kernel -----------------------------------
def _bn_relu(y, gamma, beta):
    """Training-mode BatchNorm over axis 1 (biased variance) + ReLU.

    One-pass moments: var = max(E[y^2] - mean^2, 0) (clamped against f32
    cancellation).  gamma/beta are (rows, 1), broadcast along the lane axis.
    rsqrt lands in the EUP slot.
    """
    mean = jnp.mean(y, axis=1, keepdims=True)
    var = jnp.maximum(jnp.mean(y * y, axis=1, keepdims=True) - mean * mean, 0.0)
    return jnp.maximum((y - mean) * lax.rsqrt(var + EPS) * gamma + beta, 0.0)


def aspp_kernel(x_ref, xin_ref, wbd_ref, w5_ref, wp14_ref, wp5_ref,
                pool_ref, bsel_ref, gam_ref, bet_ref, o_ref):
    # x_ref:    (K_ALL, NP)      im2col feature matrix (channels on sublanes,
    #                            pixels lane-dense)
    # xin_ref:  (C_IN, NP)       raw input, aligned operand (no sub-tile slice)
    # wbd_ref:  (4*C_ASPP, K_ALL) block-diagonal fused conv weight (transposed)
    # w5_ref:   (C_ASPP, C_IN)    aspp5 1x1 weight (transposed)
    # wp14_ref: (C_ASPP, 4*C_ASPP) wproj rows for branches 1-4 (transposed)
    # wp5_ref:  (C_ASPP, C_ASPP)   wproj rows for branch 5 (transposed)
    # pool_ref: (NP, N)          1/HW per batch block (MXU global-avg-pool)
    # bsel_ref: (N, NP)          0/1 batch-selection matrix (MXU broadcast)
    # gam_ref:  (6*C_ASPP, 1)    packed BN gammas: [br1-4 (32) | br5 (8) | out (8)]
    # bet_ref:  (6*C_ASPP, 1)    packed BN betas, same layout
    X = x_ref[...]

    # ---- branches 1-4: one fused MXU matmul + per-channel BN + ReLU ------
    y = jnp.dot(wbd_ref[...], X, preferred_element_type=jnp.float32)     # (32, NP)
    y = _bn_relu(y, gam_ref[0:4 * C_ASPP, :], bet_ref[0:4 * C_ASPP, :])

    # ---- branch 5: global avg pool (MXU) -> 1x1 conv -> BN -> ReLU -------
    gp = jnp.dot(xin_ref[...], pool_ref[...],
                 preferred_element_type=jnp.float32)                      # (C_IN, N)
    y5 = jnp.dot(w5_ref[...], gp, preferred_element_type=jnp.float32)     # (C_ASPP, N)
    y5 = _bn_relu(y5, gam_ref[4 * C_ASPP:5 * C_ASPP, :],
                  bet_ref[4 * C_ASPP:5 * C_ASPP, :])                      # BN over batch
    # Project through branch-5's slice of wproj BEFORE the spatial broadcast
    # (bilinear upsample from 1x1 with align_corners=True == broadcast).
    z5 = jnp.dot(wp5_ref[...], y5, preferred_element_type=jnp.float32)    # (C_ASPP, N)

    # ---- channel concat + 1x1 projection == split-wproj accumulation -----
    out = jnp.dot(wp14_ref[...], y, preferred_element_type=jnp.float32)   # (C_ASPP, NP)
    # Spatial broadcast of the pooled branch done on the (idle) MXU.
    out = out + jnp.dot(z5, bsel_ref[...], preferred_element_type=jnp.float32)

    # ---- final BN + ReLU, lane-dense store --------------------------------
    o_ref[...] = _bn_relu(out, gam_ref[5 * C_ASPP:6 * C_ASPP, :],
                          bet_ref[5 * C_ASPP:6 * C_ASPP, :])


# ------------------------------ wrapper ----------------------------------
def _im2col_dilated_cmajor(x_cnhw, d):
    """x: (C,N,H,W) -> (9*C, N*H*W); rows ordered (ky, kx, c), matching an
    HWIO 3x3 kernel reshaped to (9*C, C_out).  Channel-major build: no
    (pixels x features) transpose is ever materialized."""
    xp = jnp.pad(x_cnhw, ((0, 0), (0, 0), (d, d), (d, d)))
    taps = [xp[:, :, ky * d:ky * d + H, kx * d:kx * d + W]
            for ky in range(3) for kx in range(3)]                 # each (C,N,H,W)
    return jnp.stack(taps, axis=0).reshape(9 * C_IN, NP)


@jax.jit
def aspp_forward(x_nchw, w1, w2, w3, w4, w5, wproj, gamma, beta):
    # Layout plumbing stays in the wrapper (XLA), channel-major so no big
    # HBM transpose: NCHW -> (C,N,H,W) -> (K_ALL, N*H*W).
    x_c = jnp.transpose(x_nchw, (1, 0, 2, 3))                       # (C, N, H, W)
    x_in = x_c.reshape(C_IN, NP)                                    # (C_IN, NP)
    feat = jnp.concatenate(
        [x_in] + [_im2col_dilated_cmajor(x_c, d) for d in DILATIONS],
        axis=0)                                                     # (K_ALL, NP)

    # Block-diagonal fused conv weight, transposed: (4*C_ASPP, K_ALL).
    blocks = [w1,
              w2.reshape(9 * C_IN, C_ASPP),
              w3.reshape(9 * C_IN, C_ASPP),
              w4.reshape(9 * C_IN, C_ASPP)]
    wbd_t = jnp.zeros((4 * C_ASPP, K_ALL), jnp.float32)
    r = c = 0
    for blk in blocks:
        wbd_t = wbd_t.at[r:r + C_ASPP, c:c + blk.shape[0]].set(blk.T)
        r += C_ASPP
        c += blk.shape[0]

    wp14_t = wproj[:4 * C_ASPP, :].T                                # (C_ASPP, 32)
    wp5_t = wproj[4 * C_ASPP:, :].T                                 # (C_ASPP, C_ASPP)
    w5_t = w5.T                                                     # (C_ASPP, C_IN)

    # MXU helpers: global-average-pool weights and batch-selection matrix.
    eye_n = jnp.eye(N, dtype=jnp.float32)
    pool_mat = jnp.kron(eye_n, jnp.ones((HW, 1), jnp.float32) / HW)  # (NP, N)
    bsel = jnp.kron(eye_n, jnp.ones((1, HW), jnp.float32))           # (N, NP)

    # Packed BN affine params: [branches 1-4 (32) | branch 5 (8) | output (8)].
    gam = jnp.concatenate([gamma[0:4].reshape(4 * C_ASPP),
                           gamma[4], gamma[5]]).reshape(6 * C_ASPP, 1)
    bet = jnp.concatenate([beta[0:4].reshape(4 * C_ASPP),
                           beta[4], beta[5]]).reshape(6 * C_ASPP, 1)

    vmem = pl.BlockSpec(memory_space=pltpu.MemorySpace.VMEM)
    out_t = pl.pallas_call(
        aspp_kernel,
        out_shape=jax.ShapeDtypeStruct((C_ASPP, NP), jnp.float32),
        in_specs=[vmem] * 10,
        out_specs=vmem,
    )(feat, x_in, wbd_t, w5_t, wp14_t, wp5_t, pool_mat, bsel, gam, bet)

    # (C_ASPP, N*H*W) -> NCHW (trivial reshape + small leading transpose).
    return jnp.transpose(out_t.reshape(C_ASPP, N, H, W), (1, 0, 2, 3))


# ------------------------- pure-JAX reference ----------------------------
def _bn_relu_ref(y, g, b, axes):
    m = jnp.mean(y, axis=axes, keepdims=True)
    v = jnp.mean((y - m) ** 2, axis=axes, keepdims=True)
    return jnp.maximum((y - m) * lax.rsqrt(v + EPS) * g + b, 0.0)


def aspp_reference(x_nchw, w1, w2, w3, w4, w5, wproj, gamma, beta):
    x = jnp.transpose(x_nchw, (0, 2, 3, 1))  # NHWC

    def conv1x1(a, w):
        return jnp.einsum('nhwc,co->nhwo', a, w)

    def conv3x3(a, w, d):
        return lax.conv_general_dilated(
            a, w, window_strides=(1, 1), padding=[(d, d), (d, d)],
            rhs_dilation=(d, d), dimension_numbers=('NHWC', 'HWIO', 'NHWC'))

    y1 = _bn_relu_ref(conv1x1(x, w1), gamma[0], beta[0], (0, 1, 2))
    y2 = _bn_relu_ref(conv3x3(x, w2, 6),  gamma[1], beta[1], (0, 1, 2))
    y3 = _bn_relu_ref(conv3x3(x, w3, 12), gamma[2], beta[2], (0, 1, 2))
    y4 = _bn_relu_ref(conv3x3(x, w4, 18), gamma[3], beta[3], (0, 1, 2))
    gp = jnp.mean(x, axis=(1, 2))
    y5 = gp @ w5
    y5 = _bn_relu_ref(y5, gamma[4], beta[4], (0,))
    y5 = jnp.broadcast_to(y5[:, None, None, :], (N, H, W, C_ASPP))
    cat = jnp.concatenate([y1, y2, y3, y4, y5], axis=-1)
    out = _bn_relu_ref(conv1x1(cat, wproj), gamma[5], beta[5], (0, 1, 2))
    return jnp.transpose(out, (0, 3, 1, 2))


if __name__ == "__main__":
    key = jax.random.PRNGKey(0)
    ks = jax.random.split(key, 10)

    x = jax.random.normal(ks[0], (N, C_IN, H, W), jnp.float32)

    # Weights stored in HWIO / (Cin, Cout) layouts (synthetic init).
    w1 = jax.random.normal(ks[1], (C_IN, C_ASPP), jnp.float32) * 0.2
    w2 = jax.random.normal(ks[2], (3, 3, C_IN, C_ASPP), jnp.float32) * 0.2
    w3 = jax.random.normal(ks[3], (3, 3, C_IN, C_ASPP), jnp.float32) * 0.2
    w4 = jax.random.normal(ks[4], (3, 3, C_IN, C_ASPP), jnp.float32) * 0.2
    w5 = jax.random.normal(ks[5], (C_IN, C_ASPP), jnp.float32) * 0.2
    wproj = jax.random.normal(ks[6], (5 * C_ASPP, C_ASPP), jnp.float32) * 0.2
    gamma = 1.0 + 0.1 * jax.random.normal(ks[7], (6, C_ASPP), jnp.float32)
    beta = 0.1 * jax.random.normal(ks[8], (6, C_ASPP), jnp.float32)

    out = aspp_forward(x, w1, w2, w3, w4, w5, wproj, gamma, beta)
    out = jax.block_until_ready(out)

    ref = aspp_reference(x, w1, w2, w3, w4, w5, wproj, gamma, beta)
    assert out.shape == (N, C_ASPP, H, W)
    assert jnp.allclose(out, ref, atol=1e-3, rtol=1e-3), \
        f"max abs diff {jnp.max(jnp.abs(out - ref))}"

    print("KERNEL_OK")
</pallas_src>

<mosaic_0001>
module attributes {stable_mosaic.version = 11 : i64} {
  func.func @aspp_kernel(%arg0: memref<112x512xf32, #tpu.memory_space<vmem>>, %arg1: memref<4x512xf32, #tpu.memory_space<vmem>>, %arg2: memref<32x112xf32, #tpu.memory_space<vmem>>, %arg3: memref<8x4xf32, #tpu.memory_space<vmem>>, %arg4: memref<8x32xf32, #tpu.memory_space<vmem>>, %arg5: memref<8x8xf32, #tpu.memory_space<vmem>>, %arg6: memref<512x2xf32, #tpu.memory_space<vmem>>, %arg7: memref<2x512xf32, #tpu.memory_space<vmem>>, %arg8: memref<48x1xf32, #tpu.memory_space<vmem>>, %arg9: memref<48x1xf32, #tpu.memory_space<vmem>>, %arg10: memref<8x512xf32, #tpu.memory_space<vmem>>) attributes {dimension_semantics = [], scalar_prefetch = 0 : i64, scratch_operands = 0 : i64, tpu.core_type = #tpu.core_type<tc>} {
    %c0 = arith.constant 0 : index
    %c0_0 = arith.constant 0 : index
    %0 = vector.load %arg0[%c0, %c0_0] : memref<112x512xf32, #tpu.memory_space<vmem>>, vector<112x512xf32>
    %c0_1 = arith.constant 0 : index
    %c0_2 = arith.constant 0 : index
    %1 = vector.load %arg2[%c0_1, %c0_2] : memref<32x112xf32, #tpu.memory_space<vmem>>, vector<32x112xf32>
    %cst = arith.constant dense<0.000000e+00> : vector<32x512xf32>
    %2 = tpu.matmul %1, %0, %cst {dimension_numbers = #tpu.dot_dimension_numbers<[1], [0], [0], [1], [0, 0, 1, 1], [], []>} : vector<32x112xf32>, vector<112x512xf32>, vector<32x512xf32> -> vector<32x512xf32>
    %c0_3 = arith.constant 0 : index
    %c0_4 = arith.constant 0 : index
    %3 = vector.load %arg8[%c0_3, %c0_4] : memref<48x1xf32, #tpu.memory_space<vmem>>, vector<32x1xf32>
    %c0_5 = arith.constant 0 : index
    %c0_6 = arith.constant 0 : index
    %4 = vector.load %arg9[%c0_5, %c0_6] : memref<48x1xf32, #tpu.memory_space<vmem>>, vector<32x1xf32>
    %cst_7 = arith.constant dense<0.000000e+00> : vector<32xf32>
    %5 = vector.multi_reduction <add>, %2, %cst_7 [1] : vector<32x512xf32> to vector<32xf32>
    %6 = vector.shape_cast %5 : vector<32xf32> to vector<32x1xf32>
    %cst_8 = arith.constant 5.120000e+02 : f32
    %7 = vector.broadcast %cst_8 : f32 to vector<32x1xf32>
    %8 = arith.divf %6, %7 : vector<32x1xf32>
    %9 = arith.mulf %2, %2 : vector<32x512xf32>
    %cst_9 = arith.constant dense<0.000000e+00> : vector<32xf32>
    %10 = vector.multi_reduction <add>, %9, %cst_9 [1] : vector<32x512xf32> to vector<32xf32>
    %11 = vector.shape_cast %10 : vector<32xf32> to vector<32x1xf32>
    %cst_10 = arith.constant 5.120000e+02 : f32
    %12 = vector.broadcast %cst_10 : f32 to vector<32x1xf32>
    %13 = arith.divf %11, %12 : vector<32x1xf32>
    %14 = arith.mulf %8, %8 : vector<32x1xf32>
    %15 = arith.subf %13, %14 : vector<32x1xf32>
    %cst_11 = arith.constant 0.000000e+00 : f32
    %16 = vector.broadcast %cst_11 : f32 to vector<32x1xf32>
    %17 = arith.maximumf %15, %16 : vector<32x1xf32>
    %18 = vector.broadcast %8 : vector<32x1xf32> to vector<32x512xf32>
    %19 = arith.subf %2, %18 : vector<32x512xf32>
    %cst_12 = arith.constant 3.000000e-04 : f32
    %20 = vector.broadcast %cst_12 : f32 to vector<32x1xf32>
    %21 = arith.addf %17, %20 : vector<32x1xf32>
    %22 = math.rsqrt %21 : vector<32x1xf32>
    %23 = vector.broadcast %22 : vector<32x1xf32> to vector<32x512xf32>
    %24 = arith.mulf %19, %23 : vector<32x512xf32>
    %25 = vector.broadcast %3 : vector<32x1xf32> to vector<32x512xf32>
    %26 = arith.mulf %24, %25 : vector<32x512xf32>
    %27 = vector.broadcast %4 : vector<32x1xf32> to vector<32x512xf32>
    %28 = arith.addf %26, %27 : vector<32x512xf32>
    %cst_13 = arith.constant 0.000000e+00 : f32
    %29 = vector.broadcast %cst_13 : f32 to vector<32x512xf32>
    %30 = arith.maximumf %28, %29 : vector<32x512xf32>
    %c0_14 = arith.constant 0 : index
    %c0_15 = arith.constant 0 : index
    %31 = vector.load %arg1[%c0_14, %c0_15] : memref<4x512xf32, #tpu.memory_space<vmem>>, vector<4x512xf32>
    %c0_16 = arith.constant 0 : index
    %c0_17 = arith.constant 0 : index
    %32 = vector.load %arg6[%c0_16, %c0_17] : memref<512x2xf32, #tpu.memory_space<vmem>>, vector<512x2xf32>
    %cst_18 = arith.constant dense<0.000000e+00> : vector<4x2xf32>
    %33 = tpu.matmul %31, %32, %cst_18 {dimension_numbers = #tpu.dot_dimension_numbers<[1], [0], [0], [1], [0, 0, 1, 1], [], []>} : vector<4x512xf32>, vector<512x2xf32>, vector<4x2xf32> -> vector<4x2xf32>
    %c0_19 = arith.constant 0 : index
    %c0_20 = arith.constant 0 : index
    %34 = vector.load %arg3[%c0_19, %c0_20] : memref<8x4xf32, #tpu.memory_space<vmem>>, vector<8x4xf32>
    %cst_21 = arith.constant dense<0.000000e+00> : vector<8x2xf32>
    %35 = tpu.matmul %34, %33, %cst_21 {dimension_numbers = #tpu.dot_dimension_numbers<[1], [0], [0], [1], [0, 0, 1, 1], [], []>} : vector<8x4xf32>, vector<4x2xf32>, vector<8x2xf32> -> vector<8x2xf32>
    %c32 = arith.constant 32 : index
    %c0_22 = arith.constant 0 : index
    %36 = vector.load %arg8[%c32, %c0_22] : memref<48x1xf32, #tpu.memory_space<vmem>>, vector<8x1xf32>
    %c32_23 = arith.constant 32 : index
    %c0_24 = arith.constant 0 : index
    %37 = vector.load %arg9[%c32_23, %c0_24] : memref<48x1xf32, #tpu.memory_space<vmem>>, vector<8x1xf32>
    %cst_25 = arith.constant dense<0.000000e+00> : vector<8xf32>
    %38 = vector.multi_reduction <add>, %35, %cst_25 [1] : vector<8x2xf32> to vector<8xf32>
    %39 = vector.shape_cast %38 : vector<8xf32> to vector<8x1xf32>
    %cst_26 = arith.constant 2.000000e+00 : f32
    %40 = vector.broadcast %cst_26 : f32 to vector<8x1xf32>
    %41 = arith.divf %39, %40 : vector<8x1xf32>
    %42 = arith.mulf %35, %35 : vector<8x2xf32>
    %cst_27 = arith.constant dense<0.000000e+00> : vector<8xf32>
    %43 = vector.multi_reduction <add>, %42, %cst_27 [1] : vector<8x2xf32> to vector<8xf32>
    %44 = vector.shape_cast %43 : vector<8xf32> to vector<8x1xf32>
    %cst_28 = arith.constant 2.000000e+00 : f32
    %45 = vector.broadcast %cst_28 : f32 to vector<8x1xf32>
    %46 = arith.divf %44, %45 : vector<8x1xf32>
    %47 = arith.mulf %41, %41 : vector<8x1xf32>
    %48 = arith.subf %46, %47 : vector<8x1xf32>
    %cst_29 = arith.constant 0.000000e+00 : f32
    %49 = vector.broadcast %cst_29 : f32 to vector<8x1xf32>
    %50 = arith.maximumf %48, %49 : vector<8x1xf32>
    %51 = vector.broadcast %41 : vector<8x1xf32> to vector<8x2xf32>
    %52 = arith.subf %35, %51 : vector<8x2xf32>
    %cst_30 = arith.constant 3.000000e-04 : f32
    %53 = vector.broadcast %cst_30 : f32 to vector<8x1xf32>
    %54 = arith.addf %50, %53 : vector<8x1xf32>
    %55 = math.rsqrt %54 : vector<8x1xf32>
    %56 = vector.broadcast %55 : vector<8x1xf32> to vector<8x2xf32>
    %57 = arith.mulf %52, %56 : vector<8x2xf32>
    %58 = vector.broadcast %36 : vector<8x1xf32> to vector<8x2xf32>
    %59 = arith.mulf %57, %58 : vector<8x2xf32>
    %60 = vector.broadcast %37 : vector<8x1xf32> to vector<8x2xf32>
    %61 = arith.addf %59, %60 : vector<8x2xf32>
    %cst_31 = arith.constant 0.000000e+00 : f32
    %62 = vector.broadcast %cst_31 : f32 to vector<8x2xf32>
    %63 = arith.maximumf %61, %62 : vector<8x2xf32>
    %c0_32 = arith.constant 0 : index
    %c0_33 = arith.constant 0 : index
    %64 = vector.load %arg5[%c0_32, %c0_33] : memref<8x8xf32, #tpu.memory_space<vmem>>, vector<8x8xf32>
    %cst_34 = arith.constant dense<0.000000e+00> : vector<8x2xf32>
    %65 = tpu.matmul %64, %63, %cst_34 {dimension_numbers = #tpu.dot_dimension_numbers<[1], [0], [0], [1], [0, 0, 1, 1], [], []>} : vector<8x8xf32>, vector<8x2xf32>, vector<8x2xf32> -> vector<8x2xf32>
    %c0_35 = arith.constant 0 : index
    %c0_36 = arith.constant 0 : index
    %66 = vector.load %arg4[%c0_35, %c0_36] : memref<8x32xf32, #tpu.memory_space<vmem>>, vector<8x32xf32>
    %cst_37 = arith.constant dense<0.000000e+00> : vector<8x512xf32>
    %67 = tpu.matmul %66, %30, %cst_37 {dimension_numbers = #tpu.dot_dimension_numbers<[1], [0], [0], [1], [0, 0, 1, 1], [], []>} : vector<8x32xf32>, vector<32x512xf32>, vector<8x512xf32> -> vector<8x512xf32>
    %c0_38 = arith.constant 0 : index
    %c0_39 = arith.constant 0 : index
    %68 = vector.load %arg7[%c0_38, %c0_39] : memref<2x512xf32, #tpu.memory_space<vmem>>, vector<2x512xf32>
    %cst_40 = arith.constant dense<0.000000e+00> : vector<8x512xf32>
    %69 = tpu.matmul %65, %68, %cst_40 {dimension_numbers = #tpu.dot_dimension_numbers<[1], [0], [0], [1], [0, 0, 1, 1], [], []>} : vector<8x2xf32>, vector<2x512xf32>, vector<8x512xf32> -> vector<8x512xf32>
    %70 = arith.addf %67, %69 : vector<8x512xf32>
    %c40 = arith.constant 40 : index
    %c0_41 = arith.constant 0 : index
    %71 = vector.load %arg8[%c40, %c0_41] : memref<48x1xf32, #tpu.memory_space<vmem>>, vector<8x1xf32>
    %c40_42 = arith.constant 40 : index
    %c0_43 = arith.constant 0 : index
    %72 = vector.load %arg9[%c40_42, %c0_43] : memref<48x1xf32, #tpu.memory_space<vmem>>, vector<8x1xf32>
    %cst_44 = arith.constant dense<0.000000e+00> : vector<8xf32>
    %73 = vector.multi_reduction <add>, %70, %cst_44 [1] : vector<8x512xf32> to vector<8xf32>
    %74 = vector.shape_cast %73 : vector<8xf32> to vector<8x1xf32>
    %cst_45 = arith.constant 5.120000e+02 : f32
    %75 = vector.broadcast %cst_45 : f32 to vector<8x1xf32>
    %76 = arith.divf %74, %75 : vector<8x1xf32>
    %77 = arith.mulf %70, %70 : vector<8x512xf32>
    %cst_46 = arith.constant dense<0.000000e+00> : vector<8xf32>
    %78 = vector.multi_reduction <add>, %77, %cst_46 [1] : vector<8x512xf32> to vector<8xf32>
    %79 = vector.shape_cast %78 : vector<8xf32> to vector<8x1xf32>
    %cst_47 = arith.constant 5.120000e+02 : f32
    %80 = vector.broadcast %cst_47 : f32 to vector<8x1xf32>
    %81 = arith.divf %79, %80 : vector<8x1xf32>
    %82 = arith.mulf %76, %76 : vector<8x1xf32>
    %83 = arith.subf %81, %82 : vector<8x1xf32>
    %cst_48 = arith.constant 0.000000e+00 : f32
    %84 = vector.broadcast %cst_48 : f32 to vector<8x1xf32>
    %85 = arith.maximumf %83, %84 : vector<8x1xf32>
    %86 = vector.broadcast %76 : vector<8x1xf32> to vector<8x512xf32>
    %87 = arith.subf %70, %86 : vector<8x512xf32>
    %cst_49 = arith.constant 3.000000e-04 : f32
    %88 = vector.broadcast %cst_49 : f32 to vector<8x1xf32>
    %89 = arith.addf %85, %88 : vector<8x1xf32>
    %90 = math.rsqrt %89 : vector<8x1xf32>
    %91 = vector.broadcast %90 : vector<8x1xf32> to vector<8x512xf32>
    %92 = arith.mulf %87, %91 : vector<8x512xf32>
    %93 = vector.broadcast %71 : vector<8x1xf32> to vector<8x512xf32>
    %94 = arith.mulf %92, %93 : vector<8x512xf32>
    %95 = vector.broadcast %72 : vector<8x1xf32> to vector<8x512xf32>
    %96 = arith.addf %94, %95 : vector<8x512xf32>
    %cst_50 = arith.constant 0.000000e+00 : f32
    %97 = vector.broadcast %cst_50 : f32 to vector<8x512xf32>
    %98 = arith.maximumf %96, %97 : vector<8x512xf32>
    %c0_51 = arith.constant 0 : index
    %c0_52 = arith.constant 0 : index
    %99 = vector.load %arg10[%c0_51, %c0_52] : memref<8x512xf32, #tpu.memory_space<vmem>>, vector<8x512xf32>
    tpu.vector_store %arg10[%c0_51, %c0_52], %98 {strides = array<i32>} : memref<8x512xf32, #tpu.memory_space<vmem>>, vector<8x512xf32>,
    return
  }
}

</mosaic_0001>

<llo_original>
// kernel: aspp_forward.1
$region0: #{aspp_forward.1}
  #allocation0 [shape = 'u32[]', space=smem, size = 0x4, offset = 0x4, fixed_abs, tag = 'smem constant byte address 0x4 - core index']
  #allocation1 [shape = 'u32[144,128]{1,0:T(1,128)}', space=vmem, size = 0x12000, scoped, tag = 'internal scratch']
  %s0 = inlined_call_operand.vmem [shape: f32[112,512], index: 0, kind: input, shape index: {}]
  %s1 = inlined_call_operand.vmem [shape: f32[4,512], index: 1, kind: input, shape index: {}]
  %s2 = inlined_call_operand.vmem [shape: f32[32,112], index: 2, kind: input, shape index: {}]
  %s3 = inlined_call_operand.vmem [shape: f32[8,4], index: 3, kind: input, shape index: {}]
  %s4 = inlined_call_operand.vmem [shape: f32[8,32], index: 4, kind: input, shape index: {}]
  %s5 = inlined_call_operand.vmem [shape: f32[8,8], index: 5, kind: input, shape index: {}]
  %s6 = inlined_call_operand.vmem [shape: f32[512,2], index: 6, kind: input, shape index: {}]
  %s7 = inlined_call_operand.vmem [shape: f32[2,512], index: 7, kind: input, shape index: {}]
  %s8 = inlined_call_operand.vmem [shape: f32[48,1], index: 8, kind: input, shape index: {}]
  %s9 = inlined_call_operand.vmem [shape: f32[48,1], index: 9, kind: input, shape index: {}]
  %s10 = inlined_call_operand.vmem [shape: f32[8,512], index: 10, kind: output, shape index: {}]
  %s11 = sld [smem:[#allocation0]]
  $region50: #{aspp_forward.1} parent=0
    _
  %s13 = ssub.s32 1, %s11
  %s14 = scalar_select 0, %s13, %s11
  // Predicated region
  $region2: #{aspp_forward.1} parent=0 // pred_check
    _
  $region3: #{aspp_forward.1} parent=0 // pred_check_branch
    %16 = sbr.rel (0) target = $region5
  $region4: #{aspp_forward.1} parent=0 // pred_region
    _
  $region5: #{aspp_forward.1} parent=0 // pred_fallthru
    _
  // Predicated region
  $region6: #{aspp_forward.1} parent=0 // pred_check
    _
  $region7: #{aspp_forward.1} parent=0 // pred_check_branch
    %18 = sbr.rel (0) target = $region9
  $region8: #{aspp_forward.1} parent=0 // pred_region
    _
  $region9: #{aspp_forward.1} parent=0 // pred_fallthru
    _
  // Predicated region
  $region10: #{aspp_forward.1} parent=0 // pred_check
    _
  $region11: #{aspp_forward.1} parent=0 // pred_check_branch
    %20 = sbr.rel (0) target = $region13
  $region12: #{aspp_forward.1} parent=0 // pred_region
    _
  $region13: #{aspp_forward.1} parent=0 // pred_fallthru
    _
  // Predicated region
  $region14: #{aspp_forward.1} parent=0 // pred_check
    _
  $region15: #{aspp_forward.1} parent=0 // pred_check_branch
    %22 = sbr.rel (0) target = $region17
  $region16: #{aspp_forward.1} parent=0 // pred_region
    _
  $region17: #{aspp_forward.1} parent=0 // pred_fallthru
    _
  // Predicated region
  $region18: #{aspp_forward.1} parent=0 // pred_check
    _
  $region19: #{aspp_forward.1} parent=0 // pred_check_branch
    %24 = sbr.rel (0) target = $region21
  $region20: #{aspp_forward.1} parent=0 // pred_region
    _
  $region21: #{aspp_forward.1} parent=0 // pred_fallthru
    _
  // Predicated region
  $region22: #{aspp_forward.1} parent=0 // pred_check
    _
  $region23: #{aspp_forward.1} parent=0 // pred_check_branch
    %26 = sbr.rel (0) target = $region25
  $region24: #{aspp_forward.1} parent=0 // pred_region
    _
  $region25: #{aspp_forward.1} parent=0 // pred_fallthru
    _
  // Predicated region
  $region26: #{aspp_forward.1} parent=0 // pred_check
    _
  $region27: #{aspp_forward.1} parent=0 // pred_check_branch
    %28 = sbr.rel (0) target = $region29
  $region28: #{aspp_forward.1} parent=0 // pred_region
    _
  $region29: #{aspp_forward.1} parent=0 // pred_fallthru
    _
  // Predicated region
  $region30: #{aspp_forward.1} parent=0 // pred_check
    _
  $region31: #{aspp_forward.1} parent=0 // pred_check_branch
    %30 = sbr.rel (0) target = $region33
  $region32: #{aspp_forward.1} parent=0 // pred_region
    _
  $region33: #{aspp_forward.1} parent=0 // pred_fallthru
    _
  // Predicated region
  $region34: #{aspp_forward.1} parent=0 // pred_check
    _
  $region35: #{aspp_forward.1} parent=0 // pred_check_branch
    %32 = sbr.rel (0) target = $region37
  $region36: #{aspp_forward.1} parent=0 // pred_region
    _
  $region37: #{aspp_forward.1} parent=0 // pred_fallthru
    _
  // Predicated region
  $region38: #{aspp_forward.1} parent=0 // pred_check
    _
  $region39: #{aspp_forward.1} parent=0 // pred_check_branch
    %34 = sbr.rel (0) target = $region41
  $region40: #{aspp_forward.1} parent=0 // pred_region
    _
  $region41: #{aspp_forward.1} parent=0 // pred_fallthru
    _
  %v35 = vld [vmem:[%s0] sm:$0xff]
  %v36 = vld [vmem:[%s0 + $0x8] sm:$0xff]
  %v37 = vld [vmem:[%s0 + $0x10] sm:$0xff]
  %v38 = vld [vmem:[%s0 + $0x18] sm:$0xff]
  %v39 = vld [vmem:[%s0 + $0x20] sm:$0xff]
  %v40 = vld [vmem:[%s0 + $0x28] sm:$0xff]
  %v41 = vld [vmem:[%s0 + $0x30] sm:$0xff]
  %v42 = vld [vmem:[%s0 + $0x38] sm:$0xff]
  %v43 = vld [vmem:[%s0 + $0x40] sm:$0xff]
  %v44 = vld [vmem:[%s0 + $0x48] sm:$0xff]
  %v45 = vld [vmem:[%s0 + $0x50] sm:$0xff]
  %v46 = vld [vmem:[%s0 + $0x58] sm:$0xff]
  %v47 = vld [vmem:[%s0 + $0x60] sm:$0xff]
  %v48 = vld [vmem:[%s0 + $0x68] sm:$0xff]
  %v49 = vld [vmem:[%s0 + $0x70] sm:$0xff]
  %v50 = vld [vmem:[%s0 + $0x78] sm:$0xff]
  %v51 = vld [vmem:[%s0 + $0x80] sm:$0xff]
  %v52 = vld [vmem:[%s0 + $0x88] sm:$0xff]
  %v53 = vld [vmem:[%s0 + $0x90] sm:$0xff]
  %v54 = vld [vmem:[%s0 + $0x98] sm:$0xff]
  %v55 = vld [vmem:[%s0 + $0xa0] sm:$0xff]
  %v56 = vld [vmem:[%s0 + $0xa8] sm:$0xff]
  %v57 = vld [vmem:[%s0 + $0xb0] sm:$0xff]
  %v58 = vld [vmem:[%s0 + $0xb8] sm:$0xff]
  %v59 = vld [vmem:[%s0 + $0xc0] sm:$0xff]
  %v60 = vld [vmem:[%s0 + $0xc8] sm:$0xff]
  %v61 = vld [vmem:[%s0 + $0xd0] sm:$0xff]
  %v62 = vld [vmem:[%s0 + $0xd8] sm:$0xff]
  %v63 = vld [vmem:[%s0 + $0xe0] sm:$0xff]
  %v64 = vld [vmem:[%s0 + $0xe8] sm:$0xff]
  %v65 = vld [vmem:[%s0 + $0xf0] sm:$0xff]
  %v66 = vld [vmem:[%s0 + $0xf8] sm:$0xff]
  %v67 = vld [vmem:[%s0 + $0x100] sm:$0xff]
  %v68 = vld [vmem:[%s0 + $0x108] sm:$0xff]
  %v69 = vld [vmem:[%s0 + $0x110] sm:$0xff]
  %v70 = vld [vmem:[%s0 + $0x118] sm:$0xff]
  %v71 = vld [vmem:[%s0 + $0x120] sm:$0xff]
  %v72 = vld [vmem:[%s0 + $0x128] sm:$0xff]
  %v73 = vld [vmem:[%s0 + $0x130] sm:$0xff]
  %v74 = vld [vmem:[%s0 + $0x138] sm:$0xff]
  %v75 = vld [vmem:[%s0 + $0x140] sm:$0xff]
  %v76 = vld [vmem:[%s0 + $0x148] sm:$0xff]
  %v77 = vld [vmem:[%s0 + $0x150] sm:$0xff]
  %v78 = vld [vmem:[%s0 + $0x158] sm:$0xff]
  %v79 = vld [vmem:[%s0 + $0x160] sm:$0xff]
  %v80 = vld [vmem:[%s0 + $0x168] sm:$0xff]
  %v81 = vld [vmem:[%s0 + $0x170] sm:$0xff]
  %v82 = vld [vmem:[%s0 + $0x178] sm:$0xff]
  %v83 = vld [vmem:[%s0 + $0x180] sm:$0xff]
  %v84 = vld [vmem:[%s0 + $0x188] sm:$0xff]
  %v85 = vld [vmem:[%s0 + $0x190] sm:$0xff]
  %v86 = vld [vmem:[%s0 + $0x198] sm:$0xff]
  %v87 = vld [vmem:[%s0 + $0x1a0] sm:$0xff]
  %v88 = vld [vmem:[%s0 + $0x1a8] sm:$0xff]
  %v89 = vld [vmem:[%s0 + $0x1b0] sm:$0xff]
  %v90 = vld [vmem:[%s0 + $0x1b8] sm:$0xff]
  %v91 = vld [vmem:[%s2] sm:$0xff]
  %v92 = vld [vmem:[%s2 + $0x8] sm:$0xff]
  %v93 = vld [vmem:[%s2 + $0x10] sm:$0xff]
  %v94 = vld [vmem:[%s2 + $0x18] sm:$0xff]
  %vm95 = vcmask 916480
  %v97 = vsel %vm95, %v91, 0
  %v100 = vsel %vm95, %v92, 0
  %v103 = vsel %vm95, %v93, 0
  %v106 = vsel %vm95, %v94, 0
  %108 = vmatprep.subr.mxu0 0.0
  %109 = vmatpush1.msra.mxu0 0.0
  %110 = vmatprep.subr.mxu0 0.0
  %111 = vmatpush1.msra.mxu0 0.0
  %112 = vmatprep.subr.mxu0 %v88
  %113 = vmatpush1.msra.mxu0 %v87
  %114 = vmatprep.subr.mxu0 %v84
  %115 = vmatpush1.msra.mxu0 %v83
  %116 = vmatprep.subr.mxu0 %v80
  %117 = vmatpush1.msra.mxu0 %v79
  %118 = vmatprep.subr.mxu0 %v76
  %119 = vmatpush1.msra.mxu0 %v75
  %120 = vmatprep.subr.mxu0 %v72
  %121 = vmatpush1.msra.mxu0 %v71
  %122 = vmatprep.subr.mxu0 %v68
  %123 = vmatpush1.msra.mxu0 %v67
  %124 = vmatprep.subr.mxu0 %v64
  %125 = vmatpush1.msra.mxu0 %v63
  %126 = vmatprep.subr.mxu0 %v60
  %127 = vmatpush1.msra.mxu0 %v59
  %128 = vmatprep.subr.mxu0 %v56
  %129 = vmatpush1.msra.mxu0 %v55
  %130 = vmatprep.subr.mxu0 %v52
  %131 = vmatpush1.msra.mxu0 %v51
  %132 = vmatprep.subr.mxu0 %v48
  %133 = vmatpush1.msra.mxu0 %v47
  %134 = vmatprep.subr.mxu0 %v44
  %135 = vmatpush1.msra.mxu0 %v43
  %136 = vmatprep.subr.mxu0 %v40
  %137 = vmatpush1.msra.mxu0 %v39
  %138 = vmatprep.subr.mxu0 %v36
  %139 = vmatpush1.msra.mxu0 %v35
  %140 = vmatprep.subr.mxu0 0.0
  %141 = vmatpush2.msra.mxu0 0.0
  %142 = vmatprep.subr.mxu0 0.0
  %143 = vmatpush2.msra.mxu0 0.0
  %144 = vmatprep.subr.mxu0 0.0
  %145 = vmatpush2.msra.mxu0 0.0
  %146 = vmatprep.subr.mxu0 0.0
  %147 = vmatpush2.msra.mxu0 0.0
  %148 = vmatprep.subr.mxu0 0.0
  %149 = vmatpush2.msra.mxu0 0.0
  %150 = vmatprep.subr.mxu0 0.0
  %151 = vmatpush2.msra.mxu0 0.0
  %152 = vmatprep.subr.mxu0 0.0
  %153 = vmatpush2.msra.mxu0 0.0
  %154 = vmatprep.subr.mxu0 0.0
  %155 = vmatpush2.msra.mxu0 0.0
  %156 = vmatprep.subr.mxu0 0.0
  %157 = vmatpush2.msra.mxu0 0.0
  %158 = vmatprep.subr.mxu0 0.0
  %159 = vmatpush2.msra.mxu0 0.0
  %160 = vmatprep.subr.mxu0 0.0
  %161 = vmatpush2.msra.mxu0 0.0
  %162 = vmatprep.subr.mxu0 0.0
  %163 = vmatpush2.msra.mxu0 0.0
  %164 = vmatprep.subr.mxu0 0.0
  %165 = vmatpush2.msra.mxu0 0.0
  %166 = vmatprep.subr.mxu0 0.0
  %167 = vmatpush2.msra.mxu0 0.0
  %168 = vmatprep.subr.mxu0 0.0
  %169 = vmatpush2.msra.mxu0 0.0
  %170 = vmatprep.subr.mxu0 0.0
  %171 = vmatpush2.msra.mxu0 0.0
  %172 = vmatprep.mubr.f32.mxu0 0.0
  %173 = vmatmul.mubr.f32.gmra.mxu0 %v97
  %v174 = vpop.f32.mrf.mxu0
  %v175 = vadd.f32 0.0, %v174
  %v176 = vpop.f32.mrf.mxu0
  %v177 = vadd.f32 0.0, %v176
  %178 = vmatprep.mubr.f32.mxu0 0.0
  %179 = vmatmul.mubr.f32.gmra.mxu0 %v100
  %v180 = vpop.f32.mrf.mxu0
  %v181 = vadd.f32 0.0, %v180
  %v182 = vpop.f32.mrf.mxu0
  %v183 = vadd.f32 0.0, %v182
  %184 = vmatprep.mubr.f32.mxu0 0.0
  %185 = vmatmul.mubr.f32.gmra.mxu0 %v103
  %v186 = vpop.f32.mrf.mxu0
  %v187 = vadd.f32 0.0, %v186
  %v188 = vpop.f32.mrf.mxu0
  %v189 = vadd.f32 0.0, %v188
  %190 = vmatprep.mubr.f32.mxu0 0.0
  %191 = vmatmul.mubr.f32.gmra.mxu0 %v106
  %v192 = vpop.f32.mrf.mxu0
  %v193 = vadd.f32 0.0, %v192
  %v194 = vpop.f32.mrf.mxu0
  %v195 = vadd.f32 0.0, %v194
  %196 = vdwg.mxu0
  %197 = vmatprep.subr.mxu0 0.0
  %198 = vmatpush1.msra.mxu0 0.0
  %199 = vmatprep.subr.mxu0 0.0
  %200 = vmatpush1.msra.mxu0 0.0
  %201 = vmatprep.subr.mxu0 %v90
  %202 = vmatpush1.msra.mxu0 %v89
  %203 = vmatprep.subr.mxu0 %v86
  %204 = vmatpush1.msra.mxu0 %v85
  %205 = vmatprep.subr.mxu0 %v82
  %206 = vmatpush1.msra.mxu0 %v81
  %207 = vmatprep.subr.mxu0 %v78
  %208 = vmatpush1.msra.mxu0 %v77
  %209 = vmatprep.subr.mxu0 %v74
  %210 = vmatpush1.msra.mxu0 %v73
  %211 = vmatprep.subr.mxu0 %v70
  %212 = vmatpush1.msra.mxu0 %v69
  %213 = vmatprep.subr.mxu0 %v66
  %214 = vmatpush1.msra.mxu0 %v65
  %215 = vmatprep.subr.mxu0 %v62
  %216 = vmatpush1.msra.mxu0 %v61
  %217 = vmatprep.subr.mxu0 %v58
  %218 = vmatpush1.msra.mxu0 %v57
  %219 = vmatprep.subr.mxu0 %v54
  %220 = vmatpush1.msra.mxu0 %v53
  %221 = vmatprep.subr.mxu0 %v50
  %222 = vmatpush1.msra.mxu0 %v49
  %223 = vmatprep.subr.mxu0 %v46
  %224 = vmatpush1.msra.mxu0 %v45
  %225 = vmatprep.subr.mxu0 %v42
  %226 = vmatpush1.msra.mxu0 %v41
  %227 = vmatprep.subr.mxu0 %v38
  %228 = vmatpush1.msra.mxu0 %v37
  %229 = vmatprep.subr.mxu0 0.0
  %230 = vmatpush2.msra.mxu0 0.0
  %231 = vmatprep.subr.mxu0 0.0
  %232 = vmatpush2.msra.mxu0 0.0
  %233 = vmatprep.subr.mxu0 0.0
  %234 = vmatpush2.msra.mxu0 0.0
  %235 = vmatprep.subr.mxu0 0.0
  %236 = vmatpush2.msra.mxu0 0.0
  %237 = vmatprep.subr.mxu0 0.0
  %238 = vmatpush2.msra.mxu0 0.0
  %239 = vmatprep.subr.mxu0 0.0
  %240 = vmatpush2.msra.mxu0 0.0
  %241 = vmatprep.subr.mxu0 0.0
  %242 = vmatpush2.msra.mxu0 0.0
  %243 = vmatprep.subr.mxu0 0.0
  %244 = vmatpush2.msra.mxu0 0.0
  %245 = vmatprep.subr.mxu0 0.0
  %246 = vmatpush2.msra.mxu0 0.0
  %247 = vmatprep.subr.mxu0 0.0
  %248 = vmatpush2.msra.mxu0 0.0
  %249 = vmatprep.subr.mxu0 0.0
  %250 = vmatpush2.msra.mxu0 0.0
  %251 = vmatprep.subr.mxu0 0.0
  %252 = vmatpush2.msra.mxu0 0.0
  %253 = vmatprep.subr.mxu0 0.0
  %254 = vmatpush2.msra.mxu0 0.0
  %255 = vmatprep.subr.mxu0 0.0
  %256 = vmatpush2.msra.mxu0 0.0
  %257 = vmatprep.subr.mxu0 0.0
  %258 = vmatpush2.msra.mxu0 0.0
  %259 = vmatprep.subr.mxu0 0.0
  %260 = vmatpush2.msra.mxu0 0.0
  %261 = vmatprep.mubr.f32.mxu0 0.0
  %262 = vmatmul.mubr.f32.gmra.mxu0 %v97
  %v263 = vpop.f32.mrf.mxu0
  %v264 = vadd.f32 0.0, %v263
  %v265 = vpop.f32.mrf.mxu0
  %v266 = vadd.f32 0.0, %v265
  %267 = vmatprep.mubr.f32.mxu0 0.0
  %268 = vmatmul.mubr.f32.gmra.mxu0 %v100
  %v269 = vpop.f32.mrf.mxu0
  %v270 = vadd.f32 0.0, %v269
  %v271 = vpop.f32.mrf.mxu0
  %v272 = vadd.f32 0.0, %v271
  %273 = vmatprep.mubr.f32.mxu0 0.0
  %274 = vmatmul.mubr.f32.gmra.mxu0 %v103
  %v275 = vpop.f32.mrf.mxu0
  %v276 = vadd.f32 0.0, %v275
  %v277 = vpop.f32.mrf.mxu0
  %v278 = vadd.f32 0.0, %v277
  %279 = vmatprep.mubr.f32.mxu0 0.0
  %280 = vmatmul.mubr.f32.gmra.mxu0 %v106
  %v281 = vpop.f32.mrf.mxu0
  %v282 = vadd.f32 0.0, %v281
  %v283 = vpop.f32.mrf.mxu0
  %v284 = vadd.f32 0.0, %v283
  %285 = vdwg.mxu0
  %v286 = vld [vmem:[%s8] sm:$0xff]
  %v287 = vld [vmem:[%s8 + $0x8] sm:$0xff]
  %v288 = vld [vmem:[%s8 + $0x10] sm:$0xff]
  %v289 = vld [vmem:[%s8 + $0x18] sm:$0xff]
  %v290 = vld [vmem:[%s9] sm:$0xff]
  %v291 = vld [vmem:[%s9 + $0x8] sm:$0xff]
  %v292 = vld [vmem:[%s9 + $0x10] sm:$0xff]
  %v293 = vld [vmem:[%s9 + $0x18] sm:$0xff]
  %v294 = vadd.f32 %v175, %v177
  %v295 = vadd.f32 %v294, %v264
  %v296 = vadd.f32 %v295, %v266
  %297 = vadd.xlane.f32.xlu0 %v296
  %v298 = vpop.xlane.xlu0 %297
  %v299 = vadd.f32 %v181, %v183
  %v300 = vadd.f32 %v299, %v270
  %v301 = vadd.f32 %v300, %v272
  %302 = vadd.xlane.f32.xlu0 %v301
  %v303 = vpop.xlane.xlu0 %302
  %v304 = vadd.f32 %v187, %v189
  %v305 = vadd.f32 %v304, %v276
  %v306 = vadd.f32 %v305, %v278
  %307 = vadd.xlane.f32.xlu0 %v306
  %v308 = vpop.xlane.xlu0 %307
  %v309 = vadd.f32 %v193, %v195
  %v310 = vadd.f32 %v309, %v282
  %v311 = vadd.f32 %v310, %v284
  %312 = vadd.xlane.f32.xlu0 %v311
  %v313 = vpop.xlane.xlu0 %312
  %v314 = vrcp.pop 512.0
  %v315 = vmul.f32 %v298, %v314
  %v316 = vmul.f32 %v303, %v314
  %v317 = vmul.f32 %v308, %v314
  %v318 = vmul.f32 %v313, %v314
  %v319 = vmul.f32 %v175, %v175
  %v320 = vmul.f32 %v177, %v177
  %v321 = vmul.f32 %v264, %v264
  %v322 = vmul.f32 %v266, %v266
  %v323 = vmul.f32 %v181, %v181
  %v324 = vmul.f32 %v183, %v183
  %v325 = vmul.f32 %v270, %v270
  %v326 = vmul.f32 %v272, %v272
  %v327 = vmul.f32 %v187, %v187
  %v328 = vmul.f32 %v189, %v189
  %v329 = vmul.f32 %v276, %v276
  %v330 = vmul.f32 %v278, %v278
  %v331 = vmul.f32 %v193, %v193
  %v332 = vmul.f32 %v195, %v195
  %v333 = vmul.f32 %v282, %v282
  %v334 = vmul.f32 %v284, %v284
  %v335 = vadd.f32 %v319, %v320
  %v336 = vadd.f32 %v335, %v321
  %v337 = vadd.f32 %v336, %v322
  %338 = vadd.xlane.f32.xlu0 %v337
  %v339 = vpop.xlane.xlu0 %338
  %v340 = vadd.f32 %v323, %v324
  %v341 = vadd.f32 %v340, %v325
  %v342 = vadd.f32 %v341, %v326
  %343 = vadd.xlane.f32.xlu0 %v342
  %v344 = vpop.xlane.xlu0 %343
  %v345 = vadd.f32 %v327, %v328
  %v346 = vadd.f32 %v345, %v329
  %v347 = vadd.f32 %v346, %v330
  %348 = vadd.xlane.f32.xlu0 %v347
  %v349 = vpop.xlane.xlu0 %348
  %v350 = vadd.f32 %v331, %v332
  %v351 = vadd.f32 %v350, %v333
  %v352 = vadd.f32 %v351, %v334
  %353 = vadd.xlane.f32.xlu0 %v352
  %v354 = vpop.xlane.xlu0 %353
  %v355 = vmul.f32 %v339, %v314
  %v356 = vmul.f32 %v344, %v314
  %v357 = vmul.f32 %v349, %v314
  %v358 = vmul.f32 %v354, %v314
  %v359 = vmul.f32 %v315, %v315
  %v360 = vmul.f32 %v316, %v316
  %v361 = vmul.f32 %v317, %v317
  %v362 = vmul.f32 %v318, %v318
  %v363 = vsub.f32 %v355, %v359
  %v364 = vsub.f32 %v356, %v360
  %v365 = vsub.f32 %v357, %v361
  %v366 = vsub.f32 %v358, %v362
  %v367 = vmax.f32 %v363, 0.0
  %v368 = vmax.f32 %v364, 0.0
  %v369 = vmax.f32 %v365, 0.0
  %v370 = vmax.f32 %v366, 0.0
  %v371 = vsub.f32 %v175, %v315
  %v372 = vsub.f32 %v177, %v315
  %v373 = vsub.f32 %v264, %v315
  %v374 = vsub.f32 %v266, %v315
  %v375 = vsub.f32 %v181, %v316
  %v376 = vsub.f32 %v183, %v316
  %v377 = vsub.f32 %v270, %v316
  %v378 = vsub.f32 %v272, %v316
  %v379 = vsub.f32 %v187, %v317
  %v380 = vsub.f32 %v189, %v317
  %v381 = vsub.f32 %v276, %v317
  %v382 = vsub.f32 %v278, %v317
  %v383 = vsub.f32 %v193, %v318
  %v384 = vsub.f32 %v195, %v318
  %v385 = vsub.f32 %v282, %v318
  %v386 = vsub.f32 %v284, %v318
  %v387 = vadd.f32 %v367, 0.0003
  %v388 = vadd.f32 %v368, 0.0003
  %v389 = vadd.f32 %v369, 0.0003
  %v390 = vadd.f32 %v370, 0.0003
  %v391 = vrsqrt.pop %v387
  %v392 = vrsqrt.pop %v388
  %v393 = vrsqrt.pop %v389
  %v394 = vrsqrt.pop %v390
  %v395 = vmul.f32 %v371, %v391
  %v396 = vmul.f32 %v372, %v391
  %v397 = vmul.f32 %v373, %v391
  %v398 = vmul.f32 %v374, %v391
  %v399 = vmul.f32 %v375, %v392
  %v400 = vmul.f32 %v376, %v392
  %v401 = vmul.f32 %v377, %v392
  %v402 = vmul.f32 %v378, %v392
  %v403 = vmul.f32 %v379, %v393
  %v404 = vmul.f32 %v380, %v393
  %v405 = vmul.f32 %v381, %v393
  %v406 = vmul.f32 %v382, %v393
  %v407 = vmul.f32 %v383, %v394
  %v408 = vmul.f32 %v384, %v394
  %v409 = vmul.f32 %v385, %v394
  %v410 = vmul.f32 %v386, %v394
  %412 = vset.pattern.permute.xlu0 0
  %413 = vperm.xlu0 %412, %v286
  %v414 = vpop.permute.xlu0 %413
  %417 = vset.pattern.permute.xlu0 0
  %418 = vperm.xlu0 %417, %v287
  %v419 = vpop.permute.xlu0 %418
  %422 = vset.pattern.permute.xlu0 0
  %423 = vperm.xlu0 %422, %v288
  %v424 = vpop.permute.xlu0 %423
  %427 = vset.pattern.permute.xlu0 0
  %428 = vperm.xlu0 %427, %v289
  %v429 = vpop.permute.xlu0 %428
  %v431 = vmul.f32 %v395, %v414
  %v432 = vmul.f32 %v396, %v414
  %v433 = vmul.f32 %v397, %v414
  %v434 = vmul.f32 %v398, %v414
  %v435 = vmul.f32 %v399, %v419
  %v436 = vmul.f32 %v400, %v419
  %v437 = vmul.f32 %v401, %v419
  %v438 = vmul.f32 %v402, %v419
  %v439 = vmul.f32 %v403, %v424
  %v440 = vmul.f32 %v404, %v424
  %v441 = vmul.f32 %v405, %v424
  %v442 = vmul.f32 %v406, %v424
  %v443 = vmul.f32 %v407, %v429
  %v444 = vmul.f32 %v408, %v429
  %v445 = vmul.f32 %v409, %v429
  %v446 = vmul.f32 %v410, %v429
  %448 = vset.pattern.permute.xlu0 0
  %449 = vperm.xlu0 %448, %v290
  %v450 = vpop.permute.xlu0 %449
  %453 = vset.pattern.permute.xlu0 0
  %454 = vperm.xlu0 %453, %v291
  %v455 = vpop.permute.xlu0 %454
  %458 = vset.pattern.permute.xlu0 0
  %459 = vperm.xlu0 %458, %v292
  %v460 = vpop.permute.xlu0 %459
  %463 = vset.pattern.permute.xlu0 0
  %464 = vperm.xlu0 %463, %v293
  %v465 = vpop.permute.xlu0 %464
  %v467 = vadd.f32 %v431, %v450
  %v468 = vadd.f32 %v432, %v450
  %v469 = vadd.f32 %v433, %v450
  %v470 = vadd.f32 %v434, %v450
  %v471 = vadd.f32 %v435, %v455
  %v472 = vadd.f32 %v436, %v455
  %v473 = vadd.f32 %v437, %v455
  %v474 = vadd.f32 %v438, %v455
  %v475 = vadd.f32 %v439, %v460
  %v476 = vadd.f32 %v440, %v460
  %v477 = vadd.f32 %v441, %v460
  %v478 = vadd.f32 %v442, %v460
  %v479 = vadd.f32 %v443, %v465
  %v480 = vadd.f32 %v444, %v465
  %v481 = vadd.f32 %v445, %v465
  %v482 = vadd.f32 %v446, %v465
  %v483 = vmax.f32 %v467, 0.0
  %v484 = vmax.f32 %v468, 0.0
  %v485 = vmax.f32 %v469, 0.0
  %v486 = vmax.f32 %v470, 0.0
  %v487 = vmax.f32 %v471, 0.0
  %v488 = vmax.f32 %v472, 0.0
  %v489 = vmax.f32 %v473, 0.0
  %v490 = vmax.f32 %v474, 0.0
  %v491 = vmax.f32 %v475, 0.0
  %v492 = vmax.f32 %v476, 0.0
  %v493 = vmax.f32 %v477, 0.0
  %v494 = vmax.f32 %v478, 0.0
  %v495 = vmax.f32 %v479, 0.0
  %v496 = vmax.f32 %v480, 0.0
  %v497 = vmax.f32 %v481, 0.0
  %v498 = vmax.f32 %v482, 0.0
  %v499 = vld [vmem:[%s1] sm:$0xff]
  %v500 = vld [vmem:[%s1 + $0x8] sm:$0xff]
  %v501 = vld [vmem:[%s6] sm:$0xff]
  %v502 = vld [vmem:[%s6 + $0x8] sm:$0xff]
  %v503 = vld [vmem:[%s6 + $0x10] sm:$0xff]
  %v504 = vld [vmem:[%s6 + $0x18] sm:$0xff]
  %v505 = vld [vmem:[%s6 + $0x20] sm:$0xff]
  %v506 = vld [vmem:[%s6 + $0x28] sm:$0xff]
  %v507 = vld [vmem:[%s6 + $0x30] sm:$0xff]
  %v508 = vld [vmem:[%s6 + $0x38] sm:$0xff]
  %v509 = vld [vmem:[%s6 + $0x40] sm:$0xff]
  %v510 = vld [vmem:[%s6 + $0x48] sm:$0xff]
  %v511 = vld [vmem:[%s6 + $0x50] sm:$0xff]
  %v512 = vld [vmem:[%s6 + $0x58] sm:$0xff]
  %v513 = vld [vmem:[%s6 + $0x60] sm:$0xff]
  %v514 = vld [vmem:[%s6 + $0x68] sm:$0xff]
  %v515 = vld [vmem:[%s6 + $0x70] sm:$0xff]
  %v516 = vld [vmem:[%s6 + $0x78] sm:$0xff]
  %v517 = vld [vmem:[%s6 + $0x80] sm:$0xff]
  %v518 = vld [vmem:[%s6 + $0x88] sm:$0xff]
  %v519 = vld [vmem:[%s6 + $0x90] sm:$0xff]
  %v520 = vld [vmem:[%s6 + $0x98] sm:$0xff]
  %v521 = vld [vmem:[%s6 + $0xa0] sm:$0xff]
  %v522 = vld [vmem:[%s6 + $0xa8] sm:$0xff]
  %v523 = vld [vmem:[%s6 + $0xb0] sm:$0xff]
  %v524 = vld [vmem:[%s6 + $0xb8] sm:$0xff]
  %v525 = vld [vmem:[%s6 + $0xc0] sm:$0xff]
  %v526 = vld [vmem:[%s6 + $0xc8] sm:$0xff]
  %v527 = vld [vmem:[%s6 + $0xd0] sm:$0xff]
  %v528 = vld [vmem:[%s6 + $0xd8] sm:$0xff]
  %v529 = vld [vmem:[%s6 + $0xe0] sm:$0xff]
  %v530 = vld [vmem:[%s6 + $0xe8] sm:$0xff]
  %v531 = vld [vmem:[%s6 + $0xf0] sm:$0xff]
  %v532 = vld [vmem:[%s6 + $0xf8] sm:$0xff]
  %v533 = vld [vmem:[%s6 + $0x100] sm:$0xff]
  %v534 = vld [vmem:[%s6 + $0x108] sm:$0xff]
  %v535 = vld [vmem:[%s6 + $0x110] sm:$0xff]
  %v536 = vld [vmem:[%s6 + $0x118] sm:$0xff]
  %v537 = vld [vmem:[%s6 + $0x120] sm:$0xff]
  %v538 = vld [vmem:[%s6 + $0x128] sm:$0xff]
  %v539 = vld [vmem:[%s6 + $0x130] sm:$0xff]
  %v540 = vld [vmem:[%s6 + $0x138] sm:$0xff]
  %v541 = vld [vmem:[%s6 + $0x140] sm:$0xff]
  %v542 = vld [vmem:[%s6 + $0x148] sm:$0xff]
  %v543 = vld [vmem:[%s6 + $0x150] sm:$0xff]
  %v544 = vld [vmem:[%s6 + $0x158] sm:$0xff]
  %v545 = vld [vmem:[%s6 + $0x160] sm:$0xff]
  %v546 = vld [vmem:[%s6 + $0x168] sm:$0xff]
  %v547 = vld [vmem:[%s6 + $0x170] sm:$0xff]
  %v548 = vld [vmem:[%s6 + $0x178] sm:$0xff]
  %v549 = vld [vmem:[%s6 + $0x180] sm:$0xff]
  %v550 = vld [vmem:[%s6 + $0x188] sm:$0xff]
  %v551 = vld [vmem:[%s6 + $0x190] sm:$0xff]
  %v552 = vld [vmem:[%s6 + $0x198] sm:$0xff]
  %v553 = vld [vmem:[%s6 + $0x1a0] sm:$0xff]
  %v554 = vld [vmem:[%s6 + $0x1a8] sm:$0xff]
  %v555 = vld [vmem:[%s6 + $0x1b0] sm:$0xff]
  %v556 = vld [vmem:[%s6 + $0x1b8] sm:$0xff]
  %v557 = vld [vmem:[%s6 + $0x1c0] sm:$0xff]
  %v558 = vld [vmem:[%s6 + $0x1c8] sm:$0xff]
  %v559 = vld [vmem:[%s6 + $0x1d0] sm:$0xff]
  %v560 = vld [vmem:[%s6 + $0x1d8] sm:$0xff]
  %v561 = vld [vmem:[%s6 + $0x1e0] sm:$0xff]
  %v562 = vld [vmem:[%s6 + $0x1e8] sm:$0xff]
  %v563 = vld [vmem:[%s6 + $0x1f0] sm:$0xff]
  %v564 = vld [vmem:[%s6 + $0x1f8] sm:$0xff]
  %v567 = vcombine.high %v499, %v499
  %v568 = vcombine.high %v500, %v500
  %571 = vmatprep.subr.mxu0 0.0
  %572 = vmatpush1.msra.mxu0 %v516
  %573 = vmatprep.subr.mxu0 0.0
  %574 = vmatpush1.msra.mxu0 %v515
  %575 = vmatprep.subr.mxu0 0.0
  %576 = vmatpush1.msra.mxu0 %v514
  %577 = vmatprep.subr.mxu0 0.0
  %578 = vmatpush1.msra.mxu0 %v513
  %579 = vmatprep.subr.mxu0 0.0
  %580 = vmatpush1.msra.mxu0 %v512
  %581 = vmatprep.subr.mxu0 0.0
  %582 = vmatpush1.msra.mxu0 %v511
  %583 = vmatprep.subr.mxu0 0.0
  %584 = vmatpush1.msra.mxu0 %v510
  %585 = vmatprep.subr.mxu0 0.0
  %586 = vmatpush1.msra.mxu0 %v509
  %587 = vmatprep.subr.mxu0 0.0
  %588 = vmatpush1.msra.mxu0 %v508
  %589 = vmatprep.subr.mxu0 0.0
  %590 = vmatpush1.msra.mxu0 %v507
  %591 = vmatprep.subr.mxu0 0.0
  %592 = vmatpush1.msra.mxu0 %v506
  %593 = vmatprep.subr.mxu0 0.0
  %594 = vmatpush1.msra.mxu0 %v505
  %595 = vmatprep.subr.mxu0 0.0
  %596 = vmatpush1.msra.mxu0 %v504
  %597 = vmatprep.subr.mxu0 0.0
  %598 = vmatpush1.msra.mxu0 %v503
  %599 = vmatprep.subr.mxu0 0.0
  %600 = vmatpush1.msra.mxu0 %v502
  %601 = vmatprep.subr.mxu0 0.0
  %602 = vmatpush1.msra.mxu0 %v501
  %603 = vmatprep.subr.mxu0 0.0
  %604 = vmatpush2.msra.mxu0 %v532
  %605 = vmatprep.subr.mxu0 0.0
  %606 = vmatpush2.msra.mxu0 %v531
  %607 = vmatprep.subr.mxu0 0.0
  %608 = vmatpush2.msra.mxu0 %v530
  %609 = vmatprep.subr.mxu0 0.0
  %610 = vmatpush2.msra.mxu0 %v529
  %611 = vmatprep.subr.mxu0 0.0
  %612 = vmatpush2.msra.mxu0 %v528
  %613 = vmatprep.subr.mxu0 0.0
  %614 = vmatpush2.msra.mxu0 %v527
  %615 = vmatprep.subr.mxu0 0.0
  %616 = vmatpush2.msra.mxu0 %v526
  %617 = vmatprep.subr.mxu0 0.0
  %618 = vmatpush2.msra.mxu0 %v525
  %619 = vmatprep.subr.mxu0 0.0
  %620 = vmatpush2.msra.mxu0 %v524
  %621 = vmatprep.subr.mxu0 0.0
  %622 = vmatpush2.msra.mxu0 %v523
  %623 = vmatprep.subr.mxu0 0.0
  %624 = vmatpush2.msra.mxu0 %v522
  %625 = vmatprep.subr.mxu0 0.0
  %626 = vmatpush2.msra.mxu0 %v521
  %627 = vmatprep.subr.mxu0 0.0
  %628 = vmatpush2.msra.mxu0 %v520
  %629 = vmatprep.subr.mxu0 0.0
  %630 = vmatpush2.msra.mxu0 %v519
  %631 = vmatprep.subr.mxu0 0.0
  %632 = vmatpush2.msra.mxu0 %v518
  %633 = vmatprep.subr.mxu0 0.0
  %634 = vmatpush2.msra.mxu0 %v517
  %635 = vmatprep.mubr.f32.mxu0 %v567
  %636 = vmatmul.mubr.f32.gmra.mxu0 %v499
  %v637 = vpop.f32.mrf.mxu0
  %v638 = vadd.f32 0.0, %v637
  %v639 = vpop.f32.mrf.mxu0
  %640 = vdwg.mxu0
  %641 = vmatprep.subr.mxu0 0.0
  %642 = vmatpush1.msra.mxu0 %v548
  %643 = vmatprep.subr.mxu0 0.0
  %644 = vmatpush1.msra.mxu0 %v547
  %645 = vmatprep.subr.mxu0 0.0
  %646 = vmatpush1.msra.mxu0 %v546
  %647 = vmatprep.subr.mxu0 0.0
  %648 = vmatpush1.msra.mxu0 %v545
  %649 = vmatprep.subr.mxu0 0.0
  %650 = vmatpush1.msra.mxu0 %v544
  %651 = vmatprep.subr.mxu0 0.0
  %652 = vmatpush1.msra.mxu0 %v543
  %653 = vmatprep.subr.mxu0 0.0
  %654 = vmatpush1.msra.mxu0 %v542
  %655 = vmatprep.subr.mxu0 0.0
  %656 = vmatpush1.msra.mxu0 %v541
  %657 = vmatprep.subr.mxu0 0.0
  %658 = vmatpush1.msra.mxu0 %v540
  %659 = vmatprep.subr.mxu0 0.0
  %660 = vmatpush1.msra.mxu0 %v539
  %661 = vmatprep.subr.mxu0 0.0
  %662 = vmatpush1.msra.mxu0 %v538
  %663 = vmatprep.subr.mxu0 0.0
  %664 = vmatpush1.msra.mxu0 %v537
  %665 = vmatprep.subr.mxu0 0.0
  %666 = vmatpush1.msra.mxu0 %v536
  %667 = vmatprep.subr.mxu0 0.0
  %668 = vmatpush1.msra.mxu0 %v535
  %669 = vmatprep.subr.mxu0 0.0
  %670 = vmatpush1.msra.mxu0 %v534
  %671 = vmatprep.subr.mxu0 0.0
  %672 = vmatpush1.msra.mxu0 %v533
  %673 = vmatprep.subr.mxu0 0.0
  %674 = vmatpush2.msra.mxu0 %v564
  %675 = vmatprep.subr.mxu0 0.0
  %676 = vmatpush2.msra.mxu0 %v563
  %677 = vmatprep.subr.mxu0 0.0
  %678 = vmatpush2.msra.mxu0 %v562
  %679 = vmatprep.subr.mxu0 0.0
  %680 = vmatpush2.msra.mxu0 %v561
  %681 = vmatprep.subr.mxu0 0.0
  %682 = vmatpush2.msra.mxu0 %v560
  %683 = vmatprep.subr.mxu0 0.0
  %684 = vmatpush2.msra.mxu0 %v559
  %685 = vmatprep.subr.mxu0 0.0
  %686 = vmatpush2.msra.mxu0 %v558
  %687 = vmatprep.subr.mxu0 0.0
  %688 = vmatpush2.msra.mxu0 %v557
  %689 = vmatprep.subr.mxu0 0.0
  %690 = vmatpush2.msra.mxu0 %v556
  %691 = vmatprep.subr.mxu0 0.0
  %692 = vmatpush2.msra.mxu0 %v555
  %693 = vmatprep.subr.mxu0 0.0
  %694 = vmatpush2.msra.mxu0 %v554
  %695 = vmatprep.subr.mxu0 0.0
  %696 = vmatpush2.msra.mxu0 %v553
  %697 = vmatprep.subr.mxu0 0.0
  %698 = vmatpush2.msra.mxu0 %v552
  %699 = vmatprep.subr.mxu0 0.0
  %700 = vmatpush2.msra.mxu0 %v551
  %701 = vmatprep.subr.mxu0 0.0
  %702 = vmatpush2.msra.mxu0 %v550
  %703 = vmatprep.subr.mxu0 0.0
  %704 = vmatpush2.msra.mxu0 %v549
  %705 = vmatprep.mubr.f32.mxu0 %v568
  %706 = vmatmul.mubr.f32.gmra.mxu0 %v500
  %v707 = vpop.f32.mrf.mxu0
  %v708 = vadd.f32 %v638, %v707
  %v709 = vpop.f32.mrf.mxu0
  %710 = vdwg.mxu0
  %v711 = vld [vmem:[%s3] sm:$0xff]
  %vm712 = vcmask 31744
  %v714 = vsel %vm712, %v711, 0
  %vm716 = vcmask 1043456
  %v718 = vsel %vm716, %v708, 0
  %720 = vmatprep.subr.mxu0 0.0
  %721 = vmatpush1.msra.mxu0 0.0
  %722 = vmatprep.subr.mxu0 0.0
  %723 = vmatpush1.msra.mxu0 0.0
  %724 = vmatprep.subr.mxu0 0.0
  %725 = vmatpush1.msra.mxu0 0.0
  %726 = vmatprep.subr.mxu0 0.0
  %727 = vmatpush1.msra.mxu0 0.0
  %728 = vmatprep.subr.mxu0 0.0
  %729 = vmatpush1.msra.mxu0 0.0
  %730 = vmatprep.subr.mxu0 0.0
  %731 = vmatpush1.msra.mxu0 0.0
  %732 = vmatprep.subr.mxu0 0.0
  %733 = vmatpush1.msra.mxu0 0.0
  %734 = vmatprep.subr.mxu0 0.0
  %735 = vmatpush1.msra.mxu0 0.0
  %736 = vmatprep.subr.mxu0 0.0
  %737 = vmatpush1.msra.mxu0 0.0
  %738 = vmatprep.subr.mxu0 0.0
  %739 = vmatpush1.msra.mxu0 0.0
  %740 = vmatprep.subr.mxu0 0.0
  %741 = vmatpush1.msra.mxu0 0.0
  %742 = vmatprep.subr.mxu0 0.0
  %743 = vmatpush1.msra.mxu0 0.0
  %744 = vmatprep.subr.mxu0 0.0
  %745 = vmatpush1.msra.mxu0 0.0
  %746 = vmatprep.subr.mxu0 0.0
  %747 = vmatpush1.msra.mxu0 0.0
  %748 = vmatprep.subr.mxu0 0.0
  %749 = vmatpush1.msra.mxu0 0.0
  %750 = vmatprep.subr.mxu0 0.0
  %751 = vmatpush1.msra.mxu0 %v718
  %752 = vmatprep.subr.mxu0 0.0
  %753 = vmatpush2.msra.mxu0 0.0
  %754 = vmatprep.subr.mxu0 0.0
  %755 = vmatpush2.msra.mxu0 0.0
  %756 = vmatprep.subr.mxu0 0.0
  %757 = vmatpush2.msra.mxu0 0.0
  %758 = vmatprep.subr.mxu0 0.0
  %759 = vmatpush2.msra.mxu0 0.0
  %760 = vmatprep.subr.mxu0 0.0
  %761 = vmatpush2.msra.mxu0 0.0
  %762 = vmatprep.subr.mxu0 0.0
  %763 = vmatpush2.msra.mxu0 0.0
  %764 = vmatprep.subr.mxu0 0.0
  %765 = vmatpush2.msra.mxu0 0.0
  %766 = vmatprep.subr.mxu0 0.0
  %767 = vmatpush2.msra.mxu0 0.0
  %768 = vmatprep.subr.mxu0 0.0
  %769 = vmatpush2.msra.mxu0 0.0
  %770 = vmatprep.subr.mxu0 0.0
  %771 = vmatpush2.msra.mxu0 0.0
  %772 = vmatprep.subr.mxu0 0.0
  %773 = vmatpush2.msra.mxu0 0.0
  %774 = vmatprep.subr.mxu0 0.0
  %775 = vmatpush2.msra.mxu0 0.0
  %776 = vmatprep.subr.mxu0 0.0
  %777 = vmatpush2.msra.mxu0 0.0
  %778 = vmatprep.subr.mxu0 0.0
  %779 = vmatpush2.msra.mxu0 0.0
  %780 = vmatprep.subr.mxu0 0.0
  %781 = vmatpush2.msra.mxu0 0.0
  %782 = vmatprep.subr.mxu0 0.0
  %783 = vmatpush2.msra.mxu0 0.0
  %784 = vmatprep.mubr.f32.mxu0 0.0
  %785 = vmatmul.mubr.f32.gmra.mxu0 %v714
  %v786 = vpop.f32.mrf.mxu0
  %v787 = vadd.f32 0.0, %v786
  %v788 = vpop.f32.mrf.mxu0
  %789 = vdwg.mxu0
  %v790 = vld [vmem:[%s8 + $0x20] sm:$0xff]
  %v791 = vld [vmem:[%s9 + $0x20] sm:$0xff]
  %vm792 = vcmask 15360
  %v793 = vsel %vm792, %v787, 0.0
  %794 = vadd.xlane.f32.xlu0 %v793
  %v795 = vpop.xlane.xlu0 %794
  %v796 = vrcp.pop 2.0
  %v797 = vmul.f32 %v795, %v796
  %v798 = vmul.f32 %v787, %v787
  %v799 = vsel %vm792, %v798, 0.0
  %800 = vadd.xlane.f32.xlu0 %v799
  %v801 = vpop.xlane.xlu0 %800
  %v802 = vmul.f32 %v801, %v796
  %v803 = vmul.f32 %v797, %v797
  %v804 = vsub.f32 %v802, %v803
  %v805 = vmax.f32 %v804, 0.0
  %v806 = vsub.f32 %v787, %v797
  %v807 = vadd.f32 %v805, 0.0003
  %v808 = vrsqrt.pop %v807
  %v809 = vmul.f32 %v806, %v808
  %811 = vset.pattern.permute.xlu0 0
  %812 = vperm.xlu0 %811, %v790
  %v813 = vpop.permute.xlu0 %812
  %v815 = vmul.f32 %v809, %v813
  %817 = vset.pattern.permute.xlu0 0
  %818 = vperm.xlu0 %817, %v791
  %v819 = vpop.permute.xlu0 %818
  %v821 = vadd.f32 %v815, %v819
  %v822 = vmax.f32 %v821, 0.0
  %v823 = vld [vmem:[%s5] sm:$0xff]
  %vm824 = vcmask 64512
  %v826 = vsel %vm824, %v823, 0
  %828 = vmatprep.subr.mxu0 0.0
  %829 = vmatpush1.msra.mxu0 0.0
  %830 = vmatprep.subr.mxu0 0.0
  %831 = vmatpush1.msra.mxu0 0.0
  %832 = vmatprep.subr.mxu0 0.0
  %833 = vmatpush1.msra.mxu0 0.0
  %834 = vmatprep.subr.mxu0 0.0
  %835 = vmatpush1.msra.mxu0 0.0
  %836 = vmatprep.subr.mxu0 0.0
  %837 = vmatpush1.msra.mxu0 0.0
  %838 = vmatprep.subr.mxu0 0.0
  %839 = vmatpush1.msra.mxu0 0.0
  %840 = vmatprep.subr.mxu0 0.0
  %841 = vmatpush1.msra.mxu0 0.0
  %842 = vmatprep.subr.mxu0 0.0
  %843 = vmatpush1.msra.mxu0 0.0
  %844 = vmatprep.subr.mxu0 0.0
  %845 = vmatpush1.msra.mxu0 0.0
  %846 = vmatprep.subr.mxu0 0.0
  %847 = vmatpush1.msra.mxu0 0.0
  %848 = vmatprep.subr.mxu0 0.0
  %849 = vmatpush1.msra.mxu0 0.0
  %850 = vmatprep.subr.mxu0 0.0
  %851 = vmatpush1.msra.mxu0 0.0
  %852 = vmatprep.subr.mxu0 0.0
  %853 = vmatpush1.msra.mxu0 0.0
  %854 = vmatprep.subr.mxu0 0.0
  %855 = vmatpush1.msra.mxu0 0.0
  %856 = vmatprep.subr.mxu0 0.0
  %857 = vmatpush1.msra.mxu0 0.0
  %858 = vmatprep.subr.mxu0 0.0
  %859 = vmatpush1.msra.mxu0 %v822
  %860 = vmatprep.subr.mxu0 0.0
  %861 = vmatpush2.msra.mxu0 0.0
  %862 = vmatprep.subr.mxu0 0.0
  %863 = vmatpush2.msra.mxu0 0.0
  %864 = vmatprep.subr.mxu0 0.0
  %865 = vmatpush2.msra.mxu0 0.0
  %866 = vmatprep.subr.mxu0 0.0
  %867 = vmatpush2.msra.mxu0 0.0
  %868 = vmatprep.subr.mxu0 0.0
  %869 = vmatpush2.msra.mxu0 0.0
  %870 = vmatprep.subr.mxu0 0.0
  %871 = vmatpush2.msra.mxu0 0.0
  %872 = vmatprep.subr.mxu0 0.0
  %873 = vmatpush2.msra.mxu0 0.0
  %874 = vmatprep.subr.mxu0 0.0
  %875 = vmatpush2.msra.mxu0 0.0
  %876 = vmatprep.subr.mxu0 0.0
  %877 = vmatpush2.msra.mxu0 0.0
  %878 = vmatprep.subr.mxu0 0.0
  %879 = vmatpush2.msra.mxu0 0.0
  %880 = vmatprep.subr.mxu0 0.0
  %881 = vmatpush2.msra.mxu0 0.0
  %882 = vmatprep.subr.mxu0 0.0
  %883 = vmatpush2.msra.mxu0 0.0
  %884 = vmatprep.subr.mxu0 0.0
  %885 = vmatpush2.msra.mxu0 0.0
  %886 = vmatprep.subr.mxu0 0.0
  %887 = vmatpush2.msra.mxu0 0.0
  %888 = vmatprep.subr.mxu0 0.0
  %889 = vmatpush2.msra.mxu0 0.0
  %890 = vmatprep.subr.mxu0 0.0
  %891 = vmatpush2.msra.mxu0 0.0
  %892 = vmatprep.mubr.f32.mxu0 0.0
  %893 = vmatmul.mubr.f32.gmra.mxu0 %v826
  %v894 = vpop.f32.mrf.mxu0
  %v895 = vadd.f32 0.0, %v894
  %v896 = vpop.f32.mrf.mxu0
  %897 = vdwg.mxu0
  %v898 = vld [vmem:[%s4] sm:$0xff]
  %v899 = vld [vmem:[%s7] sm:$0xff]
  %v901 = vcombine.high %v899, %v899
  %v903 = vunpack.c.l.s4 1983009808
  %v904 = vunpack.c.0.s8 %v903
  %v905 = vlaneseq
  %v906 = vshrl.u32 %v905, 7
  %v907 = vsub.s32 %v904, %v906
  %v908 = vrot.slane %v899, %v907
  %v910 = vunpack.c.l.s4 1983009808
  %v911 = vunpack.c.0.s8 %v910
  %v912 = vlaneseq
  %v913 = vshrl.u32 %v912, 7
  %v914 = vsub.s32 %v911, %v913
  %v915 = vrot.slane %v901, %v914
  %v916 = vcombine.high %v908, %v908
  %v917 = vcombine.high %v915, %v915
  %v919 = vsel %vm792, %v895, 0
  %vm921 = vcmask 1041408
  %v922 = vsel %vm921, %v908, 0
  %v924 = vsel %vm921, %v916, 0
  %v926 = vsel %vm921, %v915, 0
  %v928 = vsel %vm921, %v917, 0
  %930 = vmatprep.subr.mxu0 0.0
  %931 = vmatpush1.msra.mxu0 0.0
  %932 = vmatprep.subr.mxu0 0.0
  %933 = vmatpush1.msra.mxu0 0.0
  %934 = vmatprep.subr.mxu0 0.0
  %935 = vmatpush1.msra.mxu0 0.0
  %936 = vmatprep.subr.mxu0 0.0
  %937 = vmatpush1.msra.mxu0 0.0
  %938 = vmatprep.subr.mxu0 0.0
  %939 = vmatpush1.msra.mxu0 0.0
  %940 = vmatprep.subr.mxu0 0.0
  %941 = vmatpush1.msra.mxu0 0.0
  %942 = vmatprep.subr.mxu0 0.0
  %943 = vmatpush1.msra.mxu0 0.0
  %944 = vmatprep.subr.mxu0 0.0
  %945 = vmatpush1.msra.mxu0 0.0
  %946 = vmatprep.subr.mxu0 0.0
  %947 = vmatpush1.msra.mxu0 0.0
  %948 = vmatprep.subr.mxu0 0.0
  %949 = vmatpush1.msra.mxu0 0.0
  %950 = vmatprep.subr.mxu0 0.0
  %951 = vmatpush1.msra.mxu0 0.0
  %952 = vmatprep.subr.mxu0 0.0
  %953 = vmatpush1.msra.mxu0 0.0
  %954 = vmatprep.subr.mxu0 0.0
  %955 = vmatpush1.msra.mxu0 0.0
  %956 = vmatprep.subr.mxu0 0.0
  %957 = vmatpush1.msra.mxu0 0.0
  %958 = vmatprep.subr.mxu0 0.0
  %959 = vmatpush1.msra.mxu0 0.0
  %960 = vmatprep.subr.mxu0 %v924
  %961 = vmatpush1.msra.mxu0 %v922
  %962 = vmatprep.subr.mxu0 0.0
  %963 = vmatpush2.msra.mxu0 0.0
  %964 = vmatprep.subr.mxu0 0.0
  %965 = vmatpush2.msra.mxu0 0.0
  %966 = vmatprep.subr.mxu0 0.0
  %967 = vmatpush2.msra.mxu0 0.0
  %968 = vmatprep.subr.mxu0 0.0
  %969 = vmatpush2.msra.mxu0 0.0
  %970 = vmatprep.subr.mxu0 0.0
  %971 = vmatpush2.msra.mxu0 0.0
  %972 = vmatprep.subr.mxu0 0.0
  %973 = vmatpush2.msra.mxu0 0.0
  %974 = vmatprep.subr.mxu0 0.0
  %975 = vmatpush2.msra.mxu0 0.0
  %976 = vmatprep.subr.mxu0 0.0
  %977 = vmatpush2.msra.mxu0 0.0
  %978 = vmatprep.subr.mxu0 0.0
  %979 = vmatpush2.msra.mxu0 0.0
  %980 = vmatprep.subr.mxu0 0.0
  %981 = vmatpush2.msra.mxu0 0.0
  %982 = vmatprep.subr.mxu0 0.0
  %983 = vmatpush2.msra.mxu0 0.0
  %984 = vmatprep.subr.mxu0 0.0
  %985 = vmatpush2.msra.mxu0 0.0
  %986 = vmatprep.subr.mxu0 0.0
  %987 = vmatpush2.msra.mxu0 0.0
  %988 = vmatprep.subr.mxu0 0.0
  %989 = vmatpush2.msra.mxu0 0.0
  %990 = vmatprep.subr.mxu0 0.0
  %991 = vmatpush2.msra.mxu0 0.0
  %992 = vmatprep.subr.mxu0 0.0
  %993 = vmatpush2.msra.mxu0 0.0
  %994 = vmatprep.mubr.f32.mxu0 0.0
  %995 = vmatmul.mubr.f32.gmra.mxu0 %v919
  %v996 = vpop.f32.mrf.mxu0
  %v997 = vadd.f32 0.0, %v996
  %v998 = vpop.f32.mrf.mxu0
  %v999 = vadd.f32 0.0, %v998
  %1000 = vdwg.mxu0
  %1001 = vmatprep.subr.mxu0 0.0
  %1002 = vmatpush1.msra.mxu0 0.0
  %1003 = vmatprep.subr.mxu0 0.0
  %1004 = vmatpush1.msra.mxu0 0.0
  %1005 = vmatprep.subr.mxu0 0.0
  %1006 = vmatpush1.msra.mxu0 0.0
  %1007 = vmatprep.subr.mxu0 0.0
  %1008 = vmatpush1.msra.mxu0 0.0
  %1009 = vmatprep.subr.mxu0 0.0
  %1010 = vmatpush1.msra.mxu0 0.0
  %1011 = vmatprep.subr.mxu0 0.0
  %1012 = vmatpush1.msra.mxu0 0.0
  %1013 = vmatprep.subr.mxu0 0.0
  %1014 = vmatpush1.msra.mxu0 0.0
  %1015 = vmatprep.subr.mxu0 0.0
  %1016 = vmatpush1.msra.mxu0 0.0
  %1017 = vmatprep.subr.mxu0 0.0
  %1018 = vmatpush1.msra.mxu0 0.0
  %1019 = vmatprep.subr.mxu0 0.0
  %1020 = vmatpush1.msra.mxu0 0.0
  %1021 = vmatprep.subr.mxu0 0.0
  %1022 = vmatpush1.msra.mxu0 0.0
  %1023 = vmatprep.subr.mxu0 0.0
  %1024 = vmatpush1.msra.mxu0 0.0
  %1025 = vmatprep.subr.mxu0 0.0
  %1026 = vmatpush1.msra.mxu0 0.0
  %1027 = vmatprep.subr.mxu0 0.0
  %1028 = vmatpush1.msra.mxu0 0.0
  %1029 = vmatprep.subr.mxu0 0.0
  %1030 = vmatpush1.msra.mxu0 0.0
  %1031 = vmatprep.subr.mxu0 %v928
  %1032 = vmatpush1.msra.mxu0 %v926
  %1033 = vmatprep.subr.mxu0 0.0
  %1034 = vmatpush2.msra.mxu0 0.0
  %1035 = vmatprep.subr.mxu0 0.0
  %1036 = vmatpush2.msra.mxu0 0.0
  %1037 = vmatprep.subr.mxu0 0.0
  %1038 = vmatpush2.msra.mxu0 0.0
  %1039 = vmatprep.subr.mxu0 0.0
  %1040 = vmatpush2.msra.mxu0 0.0
  %1041 = vmatprep.subr.mxu0 0.0
  %1042 = vmatpush2.msra.mxu0 0.0
  %1043 = vmatprep.subr.mxu0 0.0
  %1044 = vmatpush2.msra.mxu0 0.0
  %1045 = vmatprep.subr.mxu0 0.0
  %1046 = vmatpush2.msra.mxu0 0.0
  %1047 = vmatprep.subr.mxu0 0.0
  %1048 = vmatpush2.msra.mxu0 0.0
  %1049 = vmatprep.subr.mxu0 0.0
  %1050 = vmatpush2.msra.mxu0 0.0
  %1051 = vmatprep.subr.mxu0 0.0
  %1052 = vmatpush2.msra.mxu0 0.0
  %1053 = vmatprep.subr.mxu0 0.0
  %1054 = vmatpush2.msra.mxu0 0.0
  %1055 = vmatprep.subr.mxu0 0.0
  %1056 = vmatpush2.msra.mxu0 0.0
  %1057 = vmatprep.subr.mxu0 0.0
  %1058 = vmatpush2.msra.mxu0 0.0
  %1059 = vmatprep.subr.mxu0 0.0
  %1060 = vmatpush2.msra.mxu0 0.0
  %1061 = vmatprep.subr.mxu0 0.0
  %1062 = vmatpush2.msra.mxu0 0.0
  %1063 = vmatprep.subr.mxu0 0.0
  %1064 = vmatpush2.msra.mxu0 0.0
  %1065 = vmatprep.mubr.f32.mxu0 0.0
  %1066 = vmatmul.mubr.f32.gmra.mxu0 %v919
  %v1067 = vpop.f32.mrf.mxu0
  %v1068 = vadd.f32 0.0, %v1067
  %v1069 = vpop.f32.mrf.mxu0
  %v1070 = vadd.f32 0.0, %v1069
  %1071 = vdwg.mxu0
  %vm1072 = vcmask 261120
  %v1074 = vsel %vm1072, %v898, 0
  %1076 = vmatprep.subr.mxu0 0.0
  %1077 = vmatpush1.msra.mxu0 0.0
  %1078 = vmatprep.subr.mxu0 0.0
  %1079 = vmatpush1.msra.mxu0 0.0
  %1080 = vmatprep.subr.mxu0 0.0
  %1081 = vmatpush1.msra.mxu0 0.0
  %1082 = vmatprep.subr.mxu0 0.0
  %1083 = vmatpush1.msra.mxu0 0.0
  %1084 = vmatprep.subr.mxu0 0.0
  %1085 = vmatpush1.msra.mxu0 0.0
  %1086 = vmatprep.subr.mxu0 0.0
  %1087 = vmatpush1.msra.mxu0 0.0
  %1088 = vmatprep.subr.mxu0 0.0
  %1089 = vmatpush1.msra.mxu0 0.0
  %1090 = vmatprep.subr.mxu0 0.0
  %1091 = vmatpush1.msra.mxu0 0.0
  %1092 = vmatprep.subr.mxu0 0.0
  %1093 = vmatpush1.msra.mxu0 0.0
  %1094 = vmatprep.subr.mxu0 0.0
  %1095 = vmatpush1.msra.mxu0 0.0
  %1096 = vmatprep.subr.mxu0 0.0
  %1097 = vmatpush1.msra.mxu0 0.0
  %1098 = vmatprep.subr.mxu0 0.0
  %1099 = vmatpush1.msra.mxu0 0.0
  %1100 = vmatprep.subr.mxu0 %v496
  %1101 = vmatpush1.msra.mxu0 %v495
  %1102 = vmatprep.subr.mxu0 %v492
  %1103 = vmatpush1.msra.mxu0 %v491
  %1104 = vmatprep.subr.mxu0 %v488
  %1105 = vmatpush1.msra.mxu0 %v487
  %1106 = vmatprep.subr.mxu0 %v484
  %1107 = vmatpush1.msra.mxu0 %v483
  %1108 = vmatprep.subr.mxu0 0.0
  %1109 = vmatpush2.msra.mxu0 0.0
  %1110 = vmatprep.subr.mxu0 0.0
  %1111 = vmatpush2.msra.mxu0 0.0
  %1112 = vmatprep.subr.mxu0 0.0
  %1113 = vmatpush2.msra.mxu0 0.0
  %1114 = vmatprep.subr.mxu0 0.0
  %1115 = vmatpush2.msra.mxu0 0.0
  %1116 = vmatprep.subr.mxu0 0.0
  %1117 = vmatpush2.msra.mxu0 0.0
  %1118 = vmatprep.subr.mxu0 0.0
  %1119 = vmatpush2.msra.mxu0 0.0
  %1120 = vmatprep.subr.mxu0 0.0
  %1121 = vmatpush2.msra.mxu0 0.0
  %1122 = vmatprep.subr.mxu0 0.0
  %1123 = vmatpush2.msra.mxu0 0.0
  %1124 = vmatprep.subr.mxu0 0.0
  %1125 = vmatpush2.msra.mxu0 0.0
  %1126 = vmatprep.subr.mxu0 0.0
  %1127 = vmatpush2.msra.mxu0 0.0
  %1128 = vmatprep.subr.mxu0 0.0
  %1129 = vmatpush2.msra.mxu0 0.0
  %1130 = vmatprep.subr.mxu0 0.0
  %1131 = vmatpush2.msra.mxu0 0.0
  %1132 = vmatprep.subr.mxu0 0.0
  %1133 = vmatpush2.msra.mxu0 0.0
  %1134 = vmatprep.subr.mxu0 0.0
  %1135 = vmatpush2.msra.mxu0 0.0
  %1136 = vmatprep.subr.mxu0 0.0
  %1137 = vmatpush2.msra.mxu0 0.0
  %1138 = vmatprep.subr.mxu0 0.0
  %1139 = vmatpush2.msra.mxu0 0.0
  %1140 = vmatprep.mubr.f32.mxu0 0.0
  %1141 = vmatmul.mubr.f32.gmra.mxu0 %v1074
  %v1142 = vpop.f32.mrf.mxu0
  %v1143 = vadd.f32 %v997, %v1142
  %v1144 = vpop.f32.mrf.mxu0
  %v1145 = vadd.f32 %v999, %v1144
  %1146 = vdwg.mxu0
  %1147 = vmatprep.subr.mxu0 0.0
  %1148 = vmatpush1.msra.mxu0 0.0
  %1149 = vmatprep.subr.mxu0 0.0
  %1150 = vmatpush1.msra.mxu0 0.0
  %1151 = vmatprep.subr.mxu0 0.0
  %1152 = vmatpush1.msra.mxu0 0.0
  %1153 = vmatprep.subr.mxu0 0.0
  %1154 = vmatpush1.msra.mxu0 0.0
  %1155 = vmatprep.subr.mxu0 0.0
  %1156 = vmatpush1.msra.mxu0 0.0
  %1157 = vmatprep.subr.mxu0 0.0
  %1158 = vmatpush1.msra.mxu0 0.0
  %1159 = vmatprep.subr.mxu0 0.0
  %1160 = vmatpush1.msra.mxu0 0.0
  %1161 = vmatprep.subr.mxu0 0.0
  %1162 = vmatpush1.msra.mxu0 0.0
  %1163 = vmatprep.subr.mxu0 0.0
  %1164 = vmatpush1.msra.mxu0 0.0
  %1165 = vmatprep.subr.mxu0 0.0
  %1166 = vmatpush1.msra.mxu0 0.0
  %1167 = vmatprep.subr.mxu0 0.0
  %1168 = vmatpush1.msra.mxu0 0.0
  %1169 = vmatprep.subr.mxu0 0.0
  %1170 = vmatpush1.msra.mxu0 0.0
  %1171 = vmatprep.subr.mxu0 %v498
  %1172 = vmatpush1.msra.mxu0 %v497
  %1173 = vmatprep.subr.mxu0 %v494
  %1174 = vmatpush1.msra.mxu0 %v493
  %1175 = vmatprep.subr.mxu0 %v490
  %1176 = vmatpush1.msra.mxu0 %v489
  %1177 = vmatprep.subr.mxu0 %v486
  %1178 = vmatpush1.msra.mxu0 %v485
  %1179 = vmatprep.subr.mxu0 0.0
  %1180 = vmatpush2.msra.mxu0 0.0
  %1181 = vmatprep.subr.mxu0 0.0
  %1182 = vmatpush2.msra.mxu0 0.0
  %1183 = vmatprep.subr.mxu0 0.0
  %1184 = vmatpush2.msra.mxu0 0.0
  %1185 = vmatprep.subr.mxu0 0.0
  %1186 = vmatpush2.msra.mxu0 0.0
  %1187 = vmatprep.subr.mxu0 0.0
  %1188 = vmatpush2.msra.mxu0 0.0
  %1189 = vmatprep.subr.mxu0 0.0
  %1190 = vmatpush2.msra.mxu0 0.0
  %1191 = vmatprep.subr.mxu0 0.0
  %1192 = vmatpush2.msra.mxu0 0.0
  %1193 = vmatprep.subr.mxu0 0.0
  %1194 = vmatpush2.msra.mxu0 0.0
  %1195 = vmatprep.subr.mxu0 0.0
  %1196 = vmatpush2.msra.mxu0 0.0
  %1197 = vmatprep.subr.mxu0 0.0
  %1198 = vmatpush2.msra.mxu0 0.0
  %1199 = vmatprep.subr.mxu0 0.0
  %1200 = vmatpush2.msra.mxu0 0.0
  %1201 = vmatprep.subr.mxu0 0.0
  %1202 = vmatpush2.msra.mxu0 0.0
  %1203 = vmatprep.subr.mxu0 0.0
  %1204 = vmatpush2.msra.mxu0 0.0
  %1205 = vmatprep.subr.mxu0 0.0
  %1206 = vmatpush2.msra.mxu0 0.0
  %1207 = vmatprep.subr.mxu0 0.0
  %1208 = vmatpush2.msra.mxu0 0.0
  %1209 = vmatprep.subr.mxu0 0.0
  %1210 = vmatpush2.msra.mxu0 0.0
  %1211 = vmatprep.mubr.f32.mxu0 0.0
  %1212 = vmatmul.mubr.f32.gmra.mxu0 %v1074
  %v1213 = vpop.f32.mrf.mxu0
  %v1214 = vadd.f32 %v1068, %v1213
  %v1215 = vpop.f32.mrf.mxu0
  %v1216 = vadd.f32 %v1070, %v1215
  %1217 = vdwg.mxu0
  %v1218 = vld [vmem:[%s8 + $0x28] sm:$0xff]
  %v1219 = vld [vmem:[%s9 + $0x28] sm:$0xff]
  %v1220 = vadd.f32 %v1143, %v1145
  %v1221 = vadd.f32 %v1220, %v1214
  %v1222 = vadd.f32 %v1221, %v1216
  %1223 = vadd.xlane.f32.xlu0 %v1222
  %v1224 = vpop.xlane.xlu0 %1223
  %v1225 = vmul.f32 %v1224, %v314
  %v1226 = vmul.f32 %v1143, %v1143
  %v1227 = vmul.f32 %v1145, %v1145
  %v1228 = vmul.f32 %v1214, %v1214
  %v1229 = vmul.f32 %v1216, %v1216
  %v1230 = vadd.f32 %v1226, %v1227
  %v1231 = vadd.f32 %v1230, %v1228
  %v1232 = vadd.f32 %v1231, %v1229
  %1233 = vadd.xlane.f32.xlu0 %v1232
  %v1234 = vpop.xlane.xlu0 %1233
  %v1235 = vmul.f32 %v1234, %v314
  %v1236 = vmul.f32 %v1225, %v1225
  %v1237 = vsub.f32 %v1235, %v1236
  %v1238 = vmax.f32 %v1237, 0.0
  %v1239 = vsub.f32 %v1143, %v1225
  %v1240 = vsub.f32 %v1145, %v1225
  %v1241 = vsub.f32 %v1214, %v1225
  %v1242 = vsub.f32 %v1216, %v1225
  %v1243 = vadd.f32 %v1238, 0.0003
  %v1244 = vrsqrt.pop %v1243
  %v1245 = vmul.f32 %v1239, %v1244
  %v1246 = vmul.f32 %v1240, %v1244
  %v1247 = vmul.f32 %v1241, %v1244
  %v1248 = vmul.f32 %v1242, %v1244
  %1250 = vset.pattern.permute.xlu0 0
  %1251 = vperm.xlu0 %1250, %v1218
  %v1252 = vpop.permute.xlu0 %1251
  %v1254 = vmul.f32 %v1245, %v1252
  %v1255 = vmul.f32 %v1246, %v1252
  %v1256 = vmul.f32 %v1247, %v1252
  %v1257 = vmul.f32 %v1248, %v1252
  %1259 = vset.pattern.permute.xlu0 0
  %1260 = vperm.xlu0 %1259, %v1219
  %v1261 = vpop.permute.xlu0 %1260
  %v1263 = vadd.f32 %v1254, %v1261
  %v1264 = vadd.f32 %v1255, %v1261
  %v1265 = vadd.f32 %v1256, %v1261
  %v1266 = vadd.f32 %v1257, %v1261
  %v1267 = vmax.f32 %v1263, 0.0
  %v1268 = vmax.f32 %v1264, 0.0
  %v1269 = vmax.f32 %v1265, 0.0
  %v1270 = vmax.f32 %v1266, 0.0
  %1271 = vst [vmem:[%s10] sm:$0xff] %v1267
  %1272 = vst [vmem:[%s10 + $0x8] sm:$0xff] %v1268
  %1273 = vst [vmem:[%s10 + $0x10] sm:$0xff] %v1269
  %1274 = vst [vmem:[%s10 + $0x18] sm:$0xff] %v1270
  // Predicated region
  $region42: #{aspp_forward.1} parent=0 // pred_check
    _
  $region43: #{aspp_forward.1} parent=0 // pred_check_branch
    %1276 = sbr.rel (0) target = $region45
  $region44: #{aspp_forward.1} parent=0 // pred_region
    _
  $region45: #{aspp_forward.1} parent=0 // pred_fallthru
    _
  // Predicated region
  $region46: #{aspp_forward.1} parent=0 // pred_check
    _
  $region47: #{aspp_forward.1} parent=0 // pred_check_branch
    %1278 = sbr.rel (0) target = $region49
  $region48: #{aspp_forward.1} parent=0 // pred_region
    _
  $region49: #{aspp_forward.1} parent=0 // pred_fallthru
    _

</llo_original>
